<compile_context>
chip_gen: v6e
topology: v6e:2x2x1
jax: 0.10.0
libtpu: 0.0.40
codegen_flags: <defaults>
</compile_context>

<pallas_src>
import functools
import math

import jax
import jax.numpy as jnp
from jax.experimental import pallas as pl
from jax.experimental.pallas import tpu as pltpu


# ----------------------------- kernel --------------------------------------

def _layer_norm(v, gamma, beta, eps=1e-5):
    mu = jnp.mean(v, axis=-1, keepdims=True)
    var = jnp.mean((v - mu) ** 2, axis=-1, keepdims=True)
    return (v - mu) * jax.lax.rsqrt(var + eps) * gamma + beta


def _encoder_kernel(x0_ref, bias_ref,                  # (Bt,S,D) f32, (Bt,1,S) f32
                    g1_ref, be1_ref,
                    wqkv_ref, bqkv_ref,
                    wo_ref, bo_ref,
                    g2_ref, be2_ref,
                    w1_ref, b1_ref,
                    w2_ref, b2_ref,
                    gf_ref, bf_ref,
                    out_ref,                           # (Bt, S, D) output tile
                    x_ref,                             # VMEM scratch (Bt*S, D) f32, layer-carried
                    *, n_head, bt, seq):
    l = pl.program_id(1)                               # layer index ("arbitrary", innermost)
    R, D = x_ref.shape                                 # R = Bt * S
    dh = D // n_head
    inv_sqrt_dh = 1.0 / math.sqrt(dh)

    # ---- first layer step only: pull the embedded+positional tile into scratch ----
    @pl.when(l == 0)
    def _init():
        # Embedding * sqrt(D) + positional encoding already applied in plain XLA.
        # TODO(synk): nn.Dropout treated as identity (inference / eval semantics).
        x_ref[...] = x0_ref[...].reshape(R, D)

    x = x_ref[...]                                     # (R, D) float32

    # ---- self-attention sublayer (pre-norm) ----
    xn_b = _layer_norm(x, g1_ref[...], be1_ref[...]).astype(jnp.bfloat16)
    # fused QKV projection: one (R, D) x (D, 3D) matmul instead of three
    qkv = jnp.dot(xn_b, wqkv_ref[...], preferred_element_type=jnp.float32) + bqkv_ref[...]

    # Reference does masked_fill_(-1e9) BEFORE dividing by sqrt(dh); the scale is
    # folded into q, so the wrapper precomputed an additive bias of -1e9/sqrt(dh).
    bias = bias_ref[...]                               # (Bt, 1, S): 0 or -1e9/sqrt(dh) over keys
    ctx_heads = []
    for h in range(n_head):                            # small static loop, no (H,...) stack
        qh = (qkv[:, h * dh:(h + 1) * dh] * inv_sqrt_dh
              ).reshape(bt, seq, dh).astype(jnp.bfloat16)
        kh = qkv[:, D + h * dh:D + (h + 1) * dh].reshape(bt, seq, dh).astype(jnp.bfloat16)
        vh = qkv[:, 2 * D + h * dh:2 * D + (h + 1) * dh].reshape(bt, seq, dh).astype(jnp.bfloat16)

        s = jnp.einsum('bqd,bkd->bqk', qh, kh,
                       preferred_element_type=jnp.float32)       # (Bt, S, S) f32
        s = s + bias                                             # additive key mask
        s = s - jnp.max(s, axis=-1, keepdims=True)
        p = jnp.exp(s)
        attn = p * pl.reciprocal(jnp.sum(p, axis=-1, keepdims=True), approx=True)
        ch = jnp.einsum('bqk,bkd->bqd', attn.astype(jnp.bfloat16), vh,
                        preferred_element_type=jnp.float32)      # (Bt, S, dh)
        ctx_heads.append(ch.reshape(R, dh))
    ctx = jnp.concatenate(ctx_heads, axis=-1)                    # (R, D)

    attn_out = (jnp.dot(ctx.astype(jnp.bfloat16), wo_ref[...],
                        preferred_element_type=jnp.float32) + bo_ref[...])
    x = x + attn_out                                   # dropout == identity (eval)

    # ---- position-wise FFN sublayer (pre-norm) ----
    xn2_b = _layer_norm(x, g2_ref[...], be2_ref[...]).astype(jnp.bfloat16)
    hid = jnp.maximum(
        jnp.dot(xn2_b, w1_ref[...], preferred_element_type=jnp.float32) + b1_ref[...], 0.0)
    ffn = (jnp.dot(hid.astype(jnp.bfloat16), w2_ref[...],
                   preferred_element_type=jnp.float32) + b2_ref[...])
    x = x + ffn

    x_ref[...] = x                                     # carry activation to next layer

    # ---- last layer step only: final LayerNorm + store ----
    @pl.when(l == pl.num_programs(1) - 1)
    def _final():
        out_ref[...] = _layer_norm(x, gf_ref[...], bf_ref[...]).reshape(bt, seq, D)


# ----------------------------- params ---------------------------------------

def _positional_encode(max_seq_len, d_model):
    pos = jnp.arange(max_seq_len, dtype=jnp.float32)[:, None]
    i = jnp.arange(d_model, dtype=jnp.float32)[None, :]
    angle = pos / jnp.power(10000.0, (2.0 * jnp.floor(i / 2.0)) / d_model)
    even = (jnp.arange(d_model)[None, :] % 2) == 0
    return jnp.where(even, jnp.sin(angle), jnp.cos(angle)).astype(jnp.float32)


def init_params(key, n_src_words, src_pdx, n_head, d_model, d_ff,
                n_layers, max_seq_len):
    keys = jax.random.split(key, 1 + n_layers)
    emb = 0.1 * jax.random.normal(keys[0], (n_src_words, d_model), jnp.float32)
    emb = emb.at[src_pdx].set(0.0)                     # padding_idx row = 0

    def lin(k, din, dout):                             # weight as (in, out), bf16 for MXU
        w = (1.0 / math.sqrt(din)) * jax.random.normal(k, (din, dout), jnp.float32)
        return w.astype(jnp.bfloat16), jnp.zeros((1, dout), jnp.float32)

    layers = []
    for li in range(n_layers):
        lk = jax.random.split(keys[1 + li], 6)
        wq, bq = lin(lk[0], d_model, d_model)
        wk, bk = lin(lk[1], d_model, d_model)
        wv, bv = lin(lk[2], d_model, d_model)
        wo, bo = lin(lk[3], d_model, d_model)
        w1, b1 = lin(lk[4], d_model, d_ff)
        w2, b2 = lin(lk[5], d_ff, d_model)
        layers.append(dict(
            g1=jnp.ones((1, d_model), jnp.float32), be1=jnp.zeros((1, d_model), jnp.float32),
            wq=wq, bq=bq, wk=wk, bk=bk, wv=wv, bv=bv, wo=wo, bo=bo,
            g2=jnp.ones((1, d_model), jnp.float32), be2=jnp.zeros((1, d_model), jnp.float32),
            w1=w1, b1=b1, w2=w2, b2=b2))
    return dict(emb=emb, pe=_positional_encode(max_seq_len, d_model),
                layers=layers, n_head=n_head,
                gf=jnp.ones((1, d_model), jnp.float32),
                bf=jnp.zeros((1, d_model), jnp.float32))


# ----------------------------- wrapper ---------------------------------------

def _pick_batch_tile(B, S, target_rows=256):
    """Largest divisor Bt of B with Bt*S <= target_rows (fill MXU M dimension)."""
    bt = 1
    for d in range(1, B + 1):
        if B % d == 0 and d * S <= target_rows:
            bt = d
    return bt


def encoder_forward(params, src_tokens, src_mask):
    B, S = src_tokens.shape
    V, D = params['emb'].shape
    H = params['n_head']
    L = len(params['layers'])
    DFF = params['layers'][0]['w1'].shape[1]
    dh = D // H

    Bt = _pick_batch_tile(B, S)
    n_btiles = B // Bt

    # ---- plain-XLA front end: embedding gather, scale, positional enc, mask bias ----
    x0 = jnp.take(params['emb'], src_tokens.astype(jnp.int32), axis=0) * jnp.float32(D ** 0.5)
    x0 = x0 + params['pe'][:S][None, :, :]             # (B, S, D) f32
    # masked_fill(-1e9) happens before /sqrt(dh) in the reference; the 1/sqrt(dh)
    # scale is folded into q in the kernel, so the additive bias is -1e9/sqrt(dh).
    bias = jnp.where(src_mask, jnp.float32(-1e9 / math.sqrt(dh)),
                     jnp.float32(0.0)).reshape(B, 1, S)

    def stk(name):                                     # stack per-layer params: (L, ...)
        return jnp.stack([lp[name] for lp in params['layers']], axis=0)

    wqkv = jnp.concatenate([stk('wq'), stk('wk'), stk('wv')], axis=-1)   # (L, D, 3D) bf16
    bqkv = jnp.concatenate([stk('bq'), stk('bk'), stk('bv')], axis=-1)   # (L, 1, 3D) f32

    per_batch3 = lambda bi, l: (bi, 0, 0)
    per_layer3 = lambda bi, l: (l, 0, 0)
    shared2 = lambda bi, l: (0, 0)

    in_specs = [
        pl.BlockSpec((Bt, S, D), per_batch3),          # x0 (embedded input)
        pl.BlockSpec((Bt, 1, S), per_batch3),          # additive key-mask bias
        pl.BlockSpec((None, 1, D), per_layer3),        # g1
        pl.BlockSpec((None, 1, D), per_layer3),        # be1
        pl.BlockSpec((None, D, 3 * D), per_layer3),    # wqkv (fused)
        pl.BlockSpec((None, 1, 3 * D), per_layer3),    # bqkv
        pl.BlockSpec((None, D, D), per_layer3),        # wo
        pl.BlockSpec((None, 1, D), per_layer3),        # bo
        pl.BlockSpec((None, 1, D), per_layer3),        # g2
        pl.BlockSpec((None, 1, D), per_layer3),        # be2
        pl.BlockSpec((None, D, DFF), per_layer3),      # w1
        pl.BlockSpec((None, 1, DFF), per_layer3),      # b1
        pl.BlockSpec((None, DFF, D), per_layer3),      # w2
        pl.BlockSpec((None, 1, D), per_layer3),        # b2
        pl.BlockSpec((1, D), shared2),                 # gf
        pl.BlockSpec((1, D), shared2),                 # bf
    ]

    grid_spec = pltpu.PrefetchScalarGridSpec(
        num_scalar_prefetch=0,
        grid=(n_btiles, L),                            # batch tiles (parallel) x layers (arbitrary)
        in_specs=in_specs,
        out_specs=pl.BlockSpec((Bt, S, D), per_batch3),
        scratch_shapes=[pltpu.VMEM((Bt * S, D), jnp.float32)],
    )

    # Explicit VMEM budget: double-buffered per-layer weights + activations/scores,
    # clamped to 64 MiB (v7x physical VMEM per TensorCore).
    per_layer_w_bytes = (3 * D * D + D * D + 2 * D * DFF) * 2 + (3 * D + 5 * D + DFF) * 4
    act_bytes = Bt * S * (10 * D + DFF) * 4 + Bt * S * S * 4 + B * S * D * 4
    vmem_limit = int(min(max(4 * (2 * per_layer_w_bytes + act_bytes), 16 << 20), 64 << 20))

    fused = pl.pallas_call(
        functools.partial(_encoder_kernel, n_head=H, bt=Bt, seq=S),
        out_shape=jax.ShapeDtypeStruct((B, S, D), jnp.float32),
        grid_spec=grid_spec,
        compiler_params=pltpu.CompilerParams(
            dimension_semantics=("parallel", "arbitrary"),
            vmem_limit_bytes=vmem_limit),
    )

    return fused(x0, bias,
                 stk('g1'), stk('be1'),
                 wqkv, bqkv,
                 stk('wo'), stk('bo'),
                 stk('g2'), stk('be2'),
                 stk('w1'), stk('b1'), stk('w2'), stk('b2'),
                 params['gf'], params['bf'])


# ----------------------------- main ------------------------------------------

if __name__ == "__main__":
    n_src_words, src_pdx = 100, 0
    n_head, d_model, d_ff = 4, 32, 64
    n_layers, p_drop, max_seq_len = 2, 0.1, 16         # p_drop unused (eval mode)
    B, S = 2, 8

    key = jax.random.PRNGKey(0)
    k_tok, k_par = jax.random.split(key)

    src_tokens = jax.random.randint(k_tok, (B, S), 1, n_src_words).astype(jnp.int32)
    # pad the tails so the mask actually does something
    src_tokens = src_tokens.at[0, 6:].set(src_pdx).at[1, 5:].set(src_pdx)
    src_mask = (src_tokens == src_pdx)                 # True => masked (pad) key

    params = init_params(k_par, n_src_words, src_pdx, n_head, d_model, d_ff,
                         n_layers, max_seq_len)

    out = encoder_forward(params, src_tokens, src_mask)
    out = jax.block_until_ready(out)

    assert out.shape == (B, S, d_model), out.shape
    assert bool(jnp.all(jnp.isfinite(out)))
    print("KERNEL_OK")
</pallas_src>

<mosaic_0001>
module attributes {stable_mosaic.version = 11 : i64} {
  func.func @_encoder_kernel(%arg0: i32, %arg1: i32, %arg2: memref<2x8x32xf32, #tpu.memory_space<vmem>>, %arg3: memref<2x1x8xf32, #tpu.memory_space<vmem>>, %arg4: memref<1x1x32xf32, #tpu.memory_space<vmem>>, %arg5: memref<1x1x32xf32, #tpu.memory_space<vmem>>, %arg6: memref<1x32x96xbf16, #tpu.memory_space<vmem>>, %arg7: memref<1x1x96xf32, #tpu.memory_space<vmem>>, %arg8: memref<1x32x32xbf16, #tpu.memory_space<vmem>>, %arg9: memref<1x1x32xf32, #tpu.memory_space<vmem>>, %arg10: memref<1x1x32xf32, #tpu.memory_space<vmem>>, %arg11: memref<1x1x32xf32, #tpu.memory_space<vmem>>, %arg12: memref<1x32x64xbf16, #tpu.memory_space<vmem>>, %arg13: memref<1x1x64xf32, #tpu.memory_space<vmem>>, %arg14: memref<1x64x32xbf16, #tpu.memory_space<vmem>>, %arg15: memref<1x1x32xf32, #tpu.memory_space<vmem>>, %arg16: memref<1x32xf32, #tpu.memory_space<vmem>>, %arg17: memref<1x32xf32, #tpu.memory_space<vmem>>, %arg18: memref<2x8x32xf32, #tpu.memory_space<vmem>>, %arg19: memref<16x32xf32, #tpu.memory_space<vmem>>) attributes {dimension_semantics = [#tpu.dimension_semantics<parallel>, #tpu.dimension_semantics<arbitrary>], iteration_bounds = array<i64: 1, 2>, scalar_prefetch = 0 : i64, scratch_operands = 1 : i64, tpu.core_type = #tpu.core_type<tc>, window_params = [{transform_indices = @transform_0, window_bounds = array<i64: 2, 8, 32>}, {transform_indices = @transform_1, window_bounds = array<i64: 2, 1, 8>}, {transform_indices = @transform_2, window_bounds = array<i64: 1, 1, 32>}, {transform_indices = @transform_3, window_bounds = array<i64: 1, 1, 32>}, {transform_indices = @transform_4, window_bounds = array<i64: 1, 32, 96>}, {transform_indices = @transform_5, window_bounds = array<i64: 1, 1, 96>}, {transform_indices = @transform_6, window_bounds = array<i64: 1, 32, 32>}, {transform_indices = @transform_7, window_bounds = array<i64: 1, 1, 32>}, {transform_indices = @transform_8, window_bounds = array<i64: 1, 1, 32>}, {transform_indices = @transform_9, window_bounds = array<i64: 1, 1, 32>}, {transform_indices = @transform_10, window_bounds = array<i64: 1, 32, 64>}, {transform_indices = @transform_11, window_bounds = array<i64: 1, 1, 64>}, {transform_indices = @transform_12, window_bounds = array<i64: 1, 64, 32>}, {transform_indices = @transform_13, window_bounds = array<i64: 1, 1, 32>}, {pipeline_mode = #tpu.pipeline_mode<synchronous>, transform_indices = @transform_14, window_bounds = array<i64: 1, 32>}, {pipeline_mode = #tpu.pipeline_mode<synchronous>, transform_indices = @transform_15, window_bounds = array<i64: 1, 32>}, {transform_indices = @transform_16, window_bounds = array<i64: 2, 8, 32>}]} {
    %c0_i32 = arith.constant 0 : i32
    %0 = arith.cmpi eq, %arg1, %c0_i32 : i32
    %1 = arith.extui %0 : i1 to i32
    %c0_i32_0 = arith.constant 0 : i32
    %2 = arith.cmpi ne, %1, %c0_i32_0 : i32
    scf.if %2 {
      %c0_78 = arith.constant 0 : index
      %c0_79 = arith.constant 0 : index
      %c0_80 = arith.constant 0 : index
      %206 = vector.load %arg2[%c0_78, %c0_79, %c0_80] : memref<2x8x32xf32, #tpu.memory_space<vmem>>, vector<2x8x32xf32>
      %207 = vector.shape_cast %206 : vector<2x8x32xf32> to vector<16x32xf32>
      %c0_81 = arith.constant 0 : index
      %c0_82 = arith.constant 0 : index
      %208 = vector.load %arg19[%c0_81, %c0_82] : memref<16x32xf32, #tpu.memory_space<vmem>>, vector<16x32xf32>
      tpu.vector_store %arg19[%c0_81, %c0_82], %207 {strides = array<i32>} : memref<16x32xf32, #tpu.memory_space<vmem>>, vector<16x32xf32>,
    } else {
    }
    %c0 = arith.constant 0 : index
    %c0_1 = arith.constant 0 : index
    %3 = vector.load %arg19[%c0, %c0_1] : memref<16x32xf32, #tpu.memory_space<vmem>>, vector<16x32xf32>
    %c0_2 = arith.constant 0 : index
    %c0_3 = arith.constant 0 : index
    %c0_4 = arith.constant 0 : index
    %4 = vector.load %arg4[%c0_2, %c0_3, %c0_4] : memref<1x1x32xf32, #tpu.memory_space<vmem>>, vector<1x1x32xf32>
    %5 = vector.shape_cast %4 : vector<1x1x32xf32> to vector<1x32xf32>
    %c0_5 = arith.constant 0 : index
    %c0_6 = arith.constant 0 : index
    %c0_7 = arith.constant 0 : index
    %6 = vector.load %arg5[%c0_5, %c0_6, %c0_7] : memref<1x1x32xf32, #tpu.memory_space<vmem>>, vector<1x1x32xf32>
    %7 = vector.shape_cast %6 : vector<1x1x32xf32> to vector<1x32xf32>
    %cst = arith.constant dense<0.000000e+00> : vector<16xf32>
    %8 = vector.multi_reduction <add>, %3, %cst [1] : vector<16x32xf32> to vector<16xf32>
    %9 = vector.shape_cast %8 : vector<16xf32> to vector<16x1xf32>
    %cst_8 = arith.constant 3.200000e+01 : f32
    %10 = vector.broadcast %cst_8 : f32 to vector<16x1xf32>
    %11 = arith.divf %9, %10 : vector<16x1xf32>
    %12 = vector.broadcast %11 : vector<16x1xf32> to vector<16x32xf32>
    %13 = arith.subf %3, %12 : vector<16x32xf32>
    %14 = arith.mulf %13, %13 : vector<16x32xf32>
    %cst_9 = arith.constant dense<0.000000e+00> : vector<16xf32>
    %15 = vector.multi_reduction <add>, %14, %cst_9 [1] : vector<16x32xf32> to vector<16xf32>
    %16 = vector.shape_cast %15 : vector<16xf32> to vector<16x1xf32>
    %cst_10 = arith.constant 3.200000e+01 : f32
    %17 = vector.broadcast %cst_10 : f32 to vector<16x1xf32>
    %18 = arith.divf %16, %17 : vector<16x1xf32>
    %19 = vector.broadcast %11 : vector<16x1xf32> to vector<16x32xf32>
    %20 = arith.subf %3, %19 : vector<16x32xf32>
    %cst_11 = arith.constant 9.99999974E-6 : f32
    %21 = vector.broadcast %cst_11 : f32 to vector<16x1xf32>
    %22 = arith.addf %18, %21 : vector<16x1xf32>
    %23 = math.rsqrt %22 : vector<16x1xf32>
    %24 = vector.broadcast %23 : vector<16x1xf32> to vector<16x32xf32>
    %25 = arith.mulf %20, %24 : vector<16x32xf32>
    %26 = vector.broadcast %5 : vector<1x32xf32> to vector<16x32xf32>
    %27 = arith.mulf %25, %26 : vector<16x32xf32>
    %28 = vector.broadcast %7 : vector<1x32xf32> to vector<16x32xf32>
    %29 = arith.addf %27, %28 : vector<16x32xf32>
    %30 = arith.truncf %29 : vector<16x32xf32> to vector<16x32xbf16>
    %c0_12 = arith.constant 0 : index
    %c0_13 = arith.constant 0 : index
    %c0_14 = arith.constant 0 : index
    %31 = vector.load %arg6[%c0_12, %c0_13, %c0_14] : memref<1x32x96xbf16, #tpu.memory_space<vmem>>, vector<1x32x96xbf16>
    %32 = vector.shape_cast %31 : vector<1x32x96xbf16> to vector<32x96xbf16>
    %cst_15 = arith.constant dense<0.000000e+00> : vector<16x96xf32>
    %33 = tpu.matmul %30, %32, %cst_15 {dimension_numbers = #tpu.dot_dimension_numbers<[1], [0], [0], [1], [0, 0, 1, 1], [], []>} : vector<16x32xbf16>, vector<32x96xbf16>, vector<16x96xf32> -> vector<16x96xf32>
    %c0_16 = arith.constant 0 : index
    %c0_17 = arith.constant 0 : index
    %c0_18 = arith.constant 0 : index
    %34 = vector.load %arg7[%c0_16, %c0_17, %c0_18] : memref<1x1x96xf32, #tpu.memory_space<vmem>>, vector<1x1x96xf32>
    %35 = vector.shape_cast %34 : vector<1x1x96xf32> to vector<1x96xf32>
    %36 = vector.broadcast %35 : vector<1x96xf32> to vector<16x96xf32>
    %37 = arith.addf %33, %36 : vector<16x96xf32>
    %c0_19 = arith.constant 0 : index
    %c0_20 = arith.constant 0 : index
    %c0_21 = arith.constant 0 : index
    %38 = vector.load %arg3[%c0_19, %c0_20, %c0_21] : memref<2x1x8xf32, #tpu.memory_space<vmem>>, vector<2x1x8xf32>
    %39 = vector.extract_strided_slice %37 {offsets = [0, 0], sizes = [16, 8], strides = [1, 1]} : vector<16x96xf32> to vector<16x8xf32>
    %cst_22 = arith.constant 0.353553385 : f32
    %40 = vector.broadcast %cst_22 : f32 to vector<16x8xf32>
    %41 = arith.mulf %39, %40 : vector<16x8xf32>
    %42 = vector.shape_cast %41 : vector<16x8xf32> to vector<2x8x8xf32>
    %43 = arith.truncf %42 : vector<2x8x8xf32> to vector<2x8x8xbf16>
    %44 = vector.extract_strided_slice %37 {offsets = [0, 32], sizes = [16, 8], strides = [1, 1]} : vector<16x96xf32> to vector<16x8xf32>
    %45 = vector.shape_cast %44 : vector<16x8xf32> to vector<2x8x8xf32>
    %46 = arith.truncf %45 : vector<2x8x8xf32> to vector<2x8x8xbf16>
    %47 = vector.extract_strided_slice %37 {offsets = [0, 64], sizes = [16, 8], strides = [1, 1]} : vector<16x96xf32> to vector<16x8xf32>
    %48 = vector.shape_cast %47 : vector<16x8xf32> to vector<2x8x8xf32>
    %49 = arith.truncf %48 : vector<2x8x8xf32> to vector<2x8x8xbf16>
    "tpu.trace_start"() <{level = 10 : i32, message = "bqd,bkd->bqk"}> : () -> ()
    %cst_23 = arith.constant dense<0.000000e+00> : vector<2x8x8xf32>
    %50 = tpu.matmul %43, %46, %cst_23 {dimension_numbers = #tpu.dot_dimension_numbers<[2], [2], [1], [1], [0, 0, 0, 1, 1, 1], [0], [0]>} : vector<2x8x8xbf16>, vector<2x8x8xbf16>, vector<2x8x8xf32> -> vector<2x8x8xf32>
    "tpu.trace_stop"() : () -> ()
    %51 = vector.broadcast %38 : vector<2x1x8xf32> to vector<2x8x8xf32>
    %52 = arith.addf %50, %51 : vector<2x8x8xf32>
    %cst_24 = arith.constant dense<0xFF800000> : vector<2x8xf32>
    %53 = vector.multi_reduction <maximumf>, %52, %cst_24 [2] : vector<2x8x8xf32> to vector<2x8xf32>
    %54 = vector.shape_cast %53 : vector<2x8xf32> to vector<2x8x1xf32>
    %55 = vector.broadcast %54 : vector<2x8x1xf32> to vector<2x8x8xf32>
    %56 = arith.subf %52, %55 : vector<2x8x8xf32>
    %57 = math.exp %56 : vector<2x8x8xf32>
    %cst_25 = arith.constant dense<0.000000e+00> : vector<2x8xf32>
    %58 = vector.multi_reduction <add>, %57, %cst_25 [2] : vector<2x8x8xf32> to vector<2x8xf32>
    %59 = vector.shape_cast %58 : vector<2x8xf32> to vector<2x8x1xf32>
    %60 = tpu.reciprocal %59 {approx = true} : vector<2x8x1xf32> -> vector<2x8x1xf32>
    %61 = vector.broadcast %60 : vector<2x8x1xf32> to vector<2x8x8xf32>
    %62 = arith.mulf %57, %61 : vector<2x8x8xf32>
    %63 = arith.truncf %62 : vector<2x8x8xf32> to vector<2x8x8xbf16>
    "tpu.trace_start"() <{level = 10 : i32, message = "bqk,bkd->bqd"}> : () -> ()
    %cst_26 = arith.constant dense<0.000000e+00> : vector<2x8x8xf32>
    %64 = tpu.matmul %63, %49, %cst_26 {dimension_numbers = #tpu.dot_dimension_numbers<[2], [1], [1], [2], [0, 0, 0, 1, 1, 2], [0], [0]>} : vector<2x8x8xbf16>, vector<2x8x8xbf16>, vector<2x8x8xf32> -> vector<2x8x8xf32>
    "tpu.trace_stop"() : () -> ()
    %65 = vector.shape_cast %64 : vector<2x8x8xf32> to vector<16x8xf32>
    %66 = vector.extract_strided_slice %37 {offsets = [0, 8], sizes = [16, 8], strides = [1, 1]} : vector<16x96xf32> to vector<16x8xf32>
    %cst_27 = arith.constant 0.353553385 : f32
    %67 = vector.broadcast %cst_27 : f32 to vector<16x8xf32>
    %68 = arith.mulf %66, %67 : vector<16x8xf32>
    %69 = vector.shape_cast %68 : vector<16x8xf32> to vector<2x8x8xf32>
    %70 = arith.truncf %69 : vector<2x8x8xf32> to vector<2x8x8xbf16>
    %71 = vector.extract_strided_slice %37 {offsets = [0, 40], sizes = [16, 8], strides = [1, 1]} : vector<16x96xf32> to vector<16x8xf32>
    %72 = vector.shape_cast %71 : vector<16x8xf32> to vector<2x8x8xf32>
    %73 = arith.truncf %72 : vector<2x8x8xf32> to vector<2x8x8xbf16>
    %74 = vector.extract_strided_slice %37 {offsets = [0, 72], sizes = [16, 8], strides = [1, 1]} : vector<16x96xf32> to vector<16x8xf32>
    %75 = vector.shape_cast %74 : vector<16x8xf32> to vector<2x8x8xf32>
    %76 = arith.truncf %75 : vector<2x8x8xf32> to vector<2x8x8xbf16>
    "tpu.trace_start"() <{level = 10 : i32, message = "bqd,bkd->bqk"}> : () -> ()
    %cst_28 = arith.constant dense<0.000000e+00> : vector<2x8x8xf32>
    %77 = tpu.matmul %70, %73, %cst_28 {dimension_numbers = #tpu.dot_dimension_numbers<[2], [2], [1], [1], [0, 0, 0, 1, 1, 1], [0], [0]>} : vector<2x8x8xbf16>, vector<2x8x8xbf16>, vector<2x8x8xf32> -> vector<2x8x8xf32>
    "tpu.trace_stop"() : () -> ()
    %78 = vector.broadcast %38 : vector<2x1x8xf32> to vector<2x8x8xf32>
    %79 = arith.addf %77, %78 : vector<2x8x8xf32>
    %cst_29 = arith.constant dense<0xFF800000> : vector<2x8xf32>
    %80 = vector.multi_reduction <maximumf>, %79, %cst_29 [2] : vector<2x8x8xf32> to vector<2x8xf32>
    %81 = vector.shape_cast %80 : vector<2x8xf32> to vector<2x8x1xf32>
    %82 = vector.broadcast %81 : vector<2x8x1xf32> to vector<2x8x8xf32>
    %83 = arith.subf %79, %82 : vector<2x8x8xf32>
    %84 = math.exp %83 : vector<2x8x8xf32>
    %cst_30 = arith.constant dense<0.000000e+00> : vector<2x8xf32>
    %85 = vector.multi_reduction <add>, %84, %cst_30 [2] : vector<2x8x8xf32> to vector<2x8xf32>
    %86 = vector.shape_cast %85 : vector<2x8xf32> to vector<2x8x1xf32>
    %87 = tpu.reciprocal %86 {approx = true} : vector<2x8x1xf32> -> vector<2x8x1xf32>
    %88 = vector.broadcast %87 : vector<2x8x1xf32> to vector<2x8x8xf32>
    %89 = arith.mulf %84, %88 : vector<2x8x8xf32>
    %90 = arith.truncf %89 : vector<2x8x8xf32> to vector<2x8x8xbf16>
    "tpu.trace_start"() <{level = 10 : i32, message = "bqk,bkd->bqd"}> : () -> ()
    %cst_31 = arith.constant dense<0.000000e+00> : vector<2x8x8xf32>
    %91 = tpu.matmul %90, %76, %cst_31 {dimension_numbers = #tpu.dot_dimension_numbers<[2], [1], [1], [2], [0, 0, 0, 1, 1, 2], [0], [0]>} : vector<2x8x8xbf16>, vector<2x8x8xbf16>, vector<2x8x8xf32> -> vector<2x8x8xf32>
    "tpu.trace_stop"() : () -> ()
    %92 = vector.shape_cast %91 : vector<2x8x8xf32> to vector<16x8xf32>
    %93 = vector.extract_strided_slice %37 {offsets = [0, 16], sizes = [16, 8], strides = [1, 1]} : vector<16x96xf32> to vector<16x8xf32>
    %cst_32 = arith.constant 0.353553385 : f32
    %94 = vector.broadcast %cst_32 : f32 to vector<16x8xf32>
    %95 = arith.mulf %93, %94 : vector<16x8xf32>
    %96 = vector.shape_cast %95 : vector<16x8xf32> to vector<2x8x8xf32>
    %97 = arith.truncf %96 : vector<2x8x8xf32> to vector<2x8x8xbf16>
    %98 = vector.extract_strided_slice %37 {offsets = [0, 48], sizes = [16, 8], strides = [1, 1]} : vector<16x96xf32> to vector<16x8xf32>
    %99 = vector.shape_cast %98 : vector<16x8xf32> to vector<2x8x8xf32>
    %100 = arith.truncf %99 : vector<2x8x8xf32> to vector<2x8x8xbf16>
    %101 = vector.extract_strided_slice %37 {offsets = [0, 80], sizes = [16, 8], strides = [1, 1]} : vector<16x96xf32> to vector<16x8xf32>
    %102 = vector.shape_cast %101 : vector<16x8xf32> to vector<2x8x8xf32>
    %103 = arith.truncf %102 : vector<2x8x8xf32> to vector<2x8x8xbf16>
    "tpu.trace_start"() <{level = 10 : i32, message = "bqd,bkd->bqk"}> : () -> ()
    %cst_33 = arith.constant dense<0.000000e+00> : vector<2x8x8xf32>
    %104 = tpu.matmul %97, %100, %cst_33 {dimension_numbers = #tpu.dot_dimension_numbers<[2], [2], [1], [1], [0, 0, 0, 1, 1, 1], [0], [0]>} : vector<2x8x8xbf16>, vector<2x8x8xbf16>, vector<2x8x8xf32> -> vector<2x8x8xf32>
    "tpu.trace_stop"() : () -> ()
    %105 = vector.broadcast %38 : vector<2x1x8xf32> to vector<2x8x8xf32>
    %106 = arith.addf %104, %105 : vector<2x8x8xf32>
    %cst_34 = arith.constant dense<0xFF800000> : vector<2x8xf32>
    %107 = vector.multi_reduction <maximumf>, %106, %cst_34 [2] : vector<2x8x8xf32> to vector<2x8xf32>
    %108 = vector.shape_cast %107 : vector<2x8xf32> to vector<2x8x1xf32>
    %109 = vector.broadcast %108 : vector<2x8x1xf32> to vector<2x8x8xf32>
    %110 = arith.subf %106, %109 : vector<2x8x8xf32>
    %111 = math.exp %110 : vector<2x8x8xf32>
    %cst_35 = arith.constant dense<0.000000e+00> : vector<2x8xf32>
    %112 = vector.multi_reduction <add>, %111, %cst_35 [2] : vector<2x8x8xf32> to vector<2x8xf32>
    %113 = vector.shape_cast %112 : vector<2x8xf32> to vector<2x8x1xf32>
    %114 = tpu.reciprocal %113 {approx = true} : vector<2x8x1xf32> -> vector<2x8x1xf32>
    %115 = vector.broadcast %114 : vector<2x8x1xf32> to vector<2x8x8xf32>
    %116 = arith.mulf %111, %115 : vector<2x8x8xf32>
    %117 = arith.truncf %116 : vector<2x8x8xf32> to vector<2x8x8xbf16>
    "tpu.trace_start"() <{level = 10 : i32, message = "bqk,bkd->bqd"}> : () -> ()
    %cst_36 = arith.constant dense<0.000000e+00> : vector<2x8x8xf32>
    %118 = tpu.matmul %117, %103, %cst_36 {dimension_numbers = #tpu.dot_dimension_numbers<[2], [1], [1], [2], [0, 0, 0, 1, 1, 2], [0], [0]>} : vector<2x8x8xbf16>, vector<2x8x8xbf16>, vector<2x8x8xf32> -> vector<2x8x8xf32>
    "tpu.trace_stop"() : () -> ()
    %119 = vector.shape_cast %118 : vector<2x8x8xf32> to vector<16x8xf32>
    %120 = vector.extract_strided_slice %37 {offsets = [0, 24], sizes = [16, 8], strides = [1, 1]} : vector<16x96xf32> to vector<16x8xf32>
    %cst_37 = arith.constant 0.353553385 : f32
    %121 = vector.broadcast %cst_37 : f32 to vector<16x8xf32>
    %122 = arith.mulf %120, %121 : vector<16x8xf32>
    %123 = vector.shape_cast %122 : vector<16x8xf32> to vector<2x8x8xf32>
    %124 = arith.truncf %123 : vector<2x8x8xf32> to vector<2x8x8xbf16>
    %125 = vector.extract_strided_slice %37 {offsets = [0, 56], sizes = [16, 8], strides = [1, 1]} : vector<16x96xf32> to vector<16x8xf32>
    %126 = vector.shape_cast %125 : vector<16x8xf32> to vector<2x8x8xf32>
    %127 = arith.truncf %126 : vector<2x8x8xf32> to vector<2x8x8xbf16>
    %128 = vector.extract_strided_slice %37 {offsets = [0, 88], sizes = [16, 8], strides = [1, 1]} : vector<16x96xf32> to vector<16x8xf32>
    %129 = vector.shape_cast %128 : vector<16x8xf32> to vector<2x8x8xf32>
    %130 = arith.truncf %129 : vector<2x8x8xf32> to vector<2x8x8xbf16>
    "tpu.trace_start"() <{level = 10 : i32, message = "bqd,bkd->bqk"}> : () -> ()
    %cst_38 = arith.constant dense<0.000000e+00> : vector<2x8x8xf32>
    %131 = tpu.matmul %124, %127, %cst_38 {dimension_numbers = #tpu.dot_dimension_numbers<[2], [2], [1], [1], [0, 0, 0, 1, 1, 1], [0], [0]>} : vector<2x8x8xbf16>, vector<2x8x8xbf16>, vector<2x8x8xf32> -> vector<2x8x8xf32>
    "tpu.trace_stop"() : () -> ()
    %132 = vector.broadcast %38 : vector<2x1x8xf32> to vector<2x8x8xf32>
    %133 = arith.addf %131, %132 : vector<2x8x8xf32>
    %cst_39 = arith.constant dense<0xFF800000> : vector<2x8xf32>
    %134 = vector.multi_reduction <maximumf>, %133, %cst_39 [2] : vector<2x8x8xf32> to vector<2x8xf32>
    %135 = vector.shape_cast %134 : vector<2x8xf32> to vector<2x8x1xf32>
    %136 = vector.broadcast %135 : vector<2x8x1xf32> to vector<2x8x8xf32>
    %137 = arith.subf %133, %136 : vector<2x8x8xf32>
    %138 = math.exp %137 : vector<2x8x8xf32>
    %cst_40 = arith.constant dense<0.000000e+00> : vector<2x8xf32>
    %139 = vector.multi_reduction <add>, %138, %cst_40 [2] : vector<2x8x8xf32> to vector<2x8xf32>
    %140 = vector.shape_cast %139 : vector<2x8xf32> to vector<2x8x1xf32>
    %141 = tpu.reciprocal %140 {approx = true} : vector<2x8x1xf32> -> vector<2x8x1xf32>
    %142 = vector.broadcast %141 : vector<2x8x1xf32> to vector<2x8x8xf32>
    %143 = arith.mulf %138, %142 : vector<2x8x8xf32>
    %144 = arith.truncf %143 : vector<2x8x8xf32> to vector<2x8x8xbf16>
    "tpu.trace_start"() <{level = 10 : i32, message = "bqk,bkd->bqd"}> : () -> ()
    %cst_41 = arith.constant dense<0.000000e+00> : vector<2x8x8xf32>
    %145 = tpu.matmul %144, %130, %cst_41 {dimension_numbers = #tpu.dot_dimension_numbers<[2], [1], [1], [2], [0, 0, 0, 1, 1, 2], [0], [0]>} : vector<2x8x8xbf16>, vector<2x8x8xbf16>, vector<2x8x8xf32> -> vector<2x8x8xf32>
    "tpu.trace_stop"() : () -> ()
    %146 = vector.shape_cast %145 : vector<2x8x8xf32> to vector<16x8xf32>
    %147 = tpu.concatenate %65, %92, %119, %146 in 1 : vector<16x8xf32>, vector<16x8xf32>, vector<16x8xf32>, vector<16x8xf32> -> vector<16x32xf32>
    %148 = arith.truncf %147 : vector<16x32xf32> to vector<16x32xbf16>
    %c0_42 = arith.constant 0 : index
    %c0_43 = arith.constant 0 : index
    %c0_44 = arith.constant 0 : index
    %149 = vector.load %arg8[%c0_42, %c0_43, %c0_44] : memref<1x32x32xbf16, #tpu.memory_space<vmem>>, vector<1x32x32xbf16>
    %150 = vector.shape_cast %149 : vector<1x32x32xbf16> to vector<32x32xbf16>
    %cst_45 = arith.constant dense<0.000000e+00> : vector<16x32xf32>
    %151 = tpu.matmul %148, %150, %cst_45 {dimension_numbers = #tpu.dot_dimension_numbers<[1], [0], [0], [1], [0, 0, 1, 1], [], []>} : vector<16x32xbf16>, vector<32x32xbf16>, vector<16x32xf32> -> vector<16x32xf32>
    %c0_46 = arith.constant 0 : index
    %c0_47 = arith.constant 0 : index
    %c0_48 = arith.constant 0 : index
    %152 = vector.load %arg9[%c0_46, %c0_47, %c0_48] : memref<1x1x32xf32, #tpu.memory_space<vmem>>, vector<1x1x32xf32>
    %153 = vector.shape_cast %152 : vector<1x1x32xf32> to vector<1x32xf32>
    %154 = vector.broadcast %153 : vector<1x32xf32> to vector<16x32xf32>
    %155 = arith.addf %151, %154 : vector<16x32xf32>
    %156 = arith.addf %3, %155 : vector<16x32xf32>
    %c0_49 = arith.constant 0 : index
    %c0_50 = arith.constant 0 : index
    %c0_51 = arith.constant 0 : index
    %157 = vector.load %arg10[%c0_49, %c0_50, %c0_51] : memref<1x1x32xf32, #tpu.memory_space<vmem>>, vector<1x1x32xf32>
    %158 = vector.shape_cast %157 : vector<1x1x32xf32> to vector<1x32xf32>
    %c0_52 = arith.constant 0 : index
    %c0_53 = arith.constant 0 : index
    %c0_54 = arith.constant 0 : index
    %159 = vector.load %arg11[%c0_52, %c0_53, %c0_54] : memref<1x1x32xf32, #tpu.memory_space<vmem>>, vector<1x1x32xf32>
    %160 = vector.shape_cast %159 : vector<1x1x32xf32> to vector<1x32xf32>
    %cst_55 = arith.constant dense<0.000000e+00> : vector<16xf32>
    %161 = vector.multi_reduction <add>, %156, %cst_55 [1] : vector<16x32xf32> to vector<16xf32>
    %162 = vector.shape_cast %161 : vector<16xf32> to vector<16x1xf32>
    %cst_56 = arith.constant 3.200000e+01 : f32
    %163 = vector.broadcast %cst_56 : f32 to vector<16x1xf32>
    %164 = arith.divf %162, %163 : vector<16x1xf32>
    %165 = vector.broadcast %164 : vector<16x1xf32> to vector<16x32xf32>
    %166 = arith.subf %156, %165 : vector<16x32xf32>
    %167 = arith.mulf %166, %166 : vector<16x32xf32>
    %cst_57 = arith.constant dense<0.000000e+00> : vector<16xf32>
    %168 = vector.multi_reduction <add>, %167, %cst_57 [1] : vector<16x32xf32> to vector<16xf32>
    %169 = vector.shape_cast %168 : vector<16xf32> to vector<16x1xf32>
    %cst_58 = arith.constant 3.200000e+01 : f32
    %170 = vector.broadcast %cst_58 : f32 to vector<16x1xf32>
    %171 = arith.divf %169, %170 : vector<16x1xf32>
    %172 = vector.broadcast %164 : vector<16x1xf32> to vector<16x32xf32>
    %173 = arith.subf %156, %172 : vector<16x32xf32>
    %cst_59 = arith.constant 9.99999974E-6 : f32
    %174 = vector.broadcast %cst_59 : f32 to vector<16x1xf32>
    %175 = arith.addf %171, %174 : vector<16x1xf32>
    %176 = math.rsqrt %175 : vector<16x1xf32>
    %177 = vector.broadcast %176 : vector<16x1xf32> to vector<16x32xf32>
    %178 = arith.mulf %173, %177 : vector<16x32xf32>
    %179 = vector.broadcast %158 : vector<1x32xf32> to vector<16x32xf32>
    %180 = arith.mulf %178, %179 : vector<16x32xf32>
    %181 = vector.broadcast %160 : vector<1x32xf32> to vector<16x32xf32>
    %182 = arith.addf %180, %181 : vector<16x32xf32>
    %183 = arith.truncf %182 : vector<16x32xf32> to vector<16x32xbf16>
    %c0_60 = arith.constant 0 : index
    %c0_61 = arith.constant 0 : index
    %c0_62 = arith.constant 0 : index
    %184 = vector.load %arg12[%c0_60, %c0_61, %c0_62] : memref<1x32x64xbf16, #tpu.memory_space<vmem>>, vector<1x32x64xbf16>
    %185 = vector.shape_cast %184 : vector<1x32x64xbf16> to vector<32x64xbf16>
    %cst_63 = arith.constant dense<0.000000e+00> : vector<16x64xf32>
    %186 = tpu.matmul %183, %185, %cst_63 {dimension_numbers = #tpu.dot_dimension_numbers<[1], [0], [0], [1], [0, 0, 1, 1], [], []>} : vector<16x32xbf16>, vector<32x64xbf16>, vector<16x64xf32> -> vector<16x64xf32>
    %c0_64 = arith.constant 0 : index
    %c0_65 = arith.constant 0 : index
    %c0_66 = arith.constant 0 : index
    %187 = vector.load %arg13[%c0_64, %c0_65, %c0_66] : memref<1x1x64xf32, #tpu.memory_space<vmem>>, vector<1x1x64xf32>
    %188 = vector.shape_cast %187 : vector<1x1x64xf32> to vector<1x64xf32>
    %189 = vector.broadcast %188 : vector<1x64xf32> to vector<16x64xf32>
    %190 = arith.addf %186, %189 : vector<16x64xf32>
    %cst_67 = arith.constant 0.000000e+00 : f32
    %191 = vector.broadcast %cst_67 : f32 to vector<16x64xf32>
    %192 = arith.maximumf %190, %191 : vector<16x64xf32>
    %193 = arith.truncf %192 : vector<16x64xf32> to vector<16x64xbf16>
    %c0_68 = arith.constant 0 : index
    %c0_69 = arith.constant 0 : index
    %c0_70 = arith.constant 0 : index
    %194 = vector.load %arg14[%c0_68, %c0_69, %c0_70] : memref<1x64x32xbf16, #tpu.memory_space<vmem>>, vector<1x64x32xbf16>
    %195 = vector.shape_cast %194 : vector<1x64x32xbf16> to vector<64x32xbf16>
    %cst_71 = arith.constant dense<0.000000e+00> : vector<16x32xf32>
    %196 = tpu.matmul %193, %195, %cst_71 {dimension_numbers = #tpu.dot_dimension_numbers<[1], [0], [0], [1], [0, 0, 1, 1], [], []>} : vector<16x64xbf16>, vector<64x32xbf16>, vector<16x32xf32> -> vector<16x32xf32>
    %c0_72 = arith.constant 0 : index
    %c0_73 = arith.constant 0 : index
    %c0_74 = arith.constant 0 : index
    %197 = vector.load %arg15[%c0_72, %c0_73, %c0_74] : memref<1x1x32xf32, #tpu.memory_space<vmem>>, vector<1x1x32xf32>
    %198 = vector.shape_cast %197 : vector<1x1x32xf32> to vector<1x32xf32>
    %199 = vector.broadcast %198 : vector<1x32xf32> to vector<16x32xf32>
    %200 = arith.addf %196, %199 : vector<16x32xf32>
    %201 = arith.addf %156, %200 : vector<16x32xf32>
    %c0_75 = arith.constant 0 : index
    %c0_76 = arith.constant 0 : index
    %202 = vector.load %arg19[%c0_75, %c0_76] : memref<16x32xf32, #tpu.memory_space<vmem>>, vector<16x32xf32>
    tpu.vector_store %arg19[%c0_75, %c0_76], %201 {strides = array<i32>} : memref<16x32xf32, #tpu.memory_space<vmem>>, vector<16x32xf32>,
    %c1_i32 = arith.constant 1 : i32
    %203 = arith.cmpi eq, %arg1, %c1_i32 : i32
    %204 = arith.extui %203 : i1 to i32
    %c0_i32_77 = arith.constant 0 : i32
    %205 = arith.cmpi ne, %204, %c0_i32_77 : i32
    scf.if %205 {
      %c0_78 = arith.constant 0 : index
      %c0_79 = arith.constant 0 : index
      %206 = vector.load %arg16[%c0_78, %c0_79] : memref<1x32xf32, #tpu.memory_space<vmem>>, vector<1x32xf32>
      %c0_80 = arith.constant 0 : index
      %c0_81 = arith.constant 0 : index
      %207 = vector.load %arg17[%c0_80, %c0_81] : memref<1x32xf32, #tpu.memory_space<vmem>>, vector<1x32xf32>
      %cst_82 = arith.constant dense<0.000000e+00> : vector<16xf32>
      %208 = vector.multi_reduction <add>, %201, %cst_82 [1] : vector<16x32xf32> to vector<16xf32>
      %209 = vector.shape_cast %208 : vector<16xf32> to vector<16x1xf32>
      %cst_83 = arith.constant 3.200000e+01 : f32
      %210 = vector.broadcast %cst_83 : f32 to vector<16x1xf32>
      %211 = arith.divf %209, %210 : vector<16x1xf32>
      %212 = vector.broadcast %211 : vector<16x1xf32> to vector<16x32xf32>
      %213 = arith.subf %201, %212 : vector<16x32xf32>
      %214 = arith.mulf %213, %213 : vector<16x32xf32>
      %cst_84 = arith.constant dense<0.000000e+00> : vector<16xf32>
      %215 = vector.multi_reduction <add>, %214, %cst_84 [1] : vector<16x32xf32> to vector<16xf32>
      %216 = vector.shape_cast %215 : vector<16xf32> to vector<16x1xf32>
      %cst_85 = arith.constant 3.200000e+01 : f32
      %217 = vector.broadcast %cst_85 : f32 to vector<16x1xf32>
      %218 = arith.divf %216, %217 : vector<16x1xf32>
      %219 = vector.broadcast %211 : vector<16x1xf32> to vector<16x32xf32>
      %220 = arith.subf %201, %219 : vector<16x32xf32>
      %cst_86 = arith.constant 9.99999974E-6 : f32
      %221 = vector.broadcast %cst_86 : f32 to vector<16x1xf32>
      %222 = arith.addf %218, %221 : vector<16x1xf32>
      %223 = math.rsqrt %222 : vector<16x1xf32>
      %224 = vector.broadcast %223 : vector<16x1xf32> to vector<16x32xf32>
      %225 = arith.mulf %220, %224 : vector<16x32xf32>
      %226 = vector.broadcast %206 : vector<1x32xf32> to vector<16x32xf32>
      %227 = arith.mulf %225, %226 : vector<16x32xf32>
      %228 = vector.broadcast %207 : vector<1x32xf32> to vector<16x32xf32>
      %229 = arith.addf %227, %228 : vector<16x32xf32>
      %230 = vector.shape_cast %229 : vector<16x32xf32> to vector<2x8x32xf32>
      %c0_87 = arith.constant 0 : index
      %c0_88 = arith.constant 0 : index
      %c0_89 = arith.constant 0 : index
      %231 = vector.load %arg18[%c0_87, %c0_88, %c0_89] : memref<2x8x32xf32, #tpu.memory_space<vmem>>, vector<2x8x32xf32>
      tpu.vector_store %arg18[%c0_87, %c0_88, %c0_89], %230 {strides = array<i32>} : memref<2x8x32xf32, #tpu.memory_space<vmem>>, vector<2x8x32xf32>,
    } else {
    }
    return
  }
  func.func @transform_0(%arg0: i32, %arg1: i32) -> (i32, i32, i32) {
    %c0_i32 = arith.constant 0 : i32
    %c0_i32_0 = arith.constant 0 : i32
    %c0_i32_1 = arith.constant 0 : i32
    return %arg0, %c0_i32, %c0_i32_0 : i32, i32, i32
  }
  func.func @transform_1(%arg0: i32, %arg1: i32) -> (i32, i32, i32) {
    %c0_i32 = arith.constant 0 : i32
    %c0_i32_0 = arith.constant 0 : i32
    %c0_i32_1 = arith.constant 0 : i32
    return %arg0, %c0_i32, %c0_i32_0 : i32, i32, i32
  }
  func.func @transform_2(%arg0: i32, %arg1: i32) -> (i32, i32, i32) {
    %c0_i32 = arith.constant 0 : i32
    %c0_i32_0 = arith.constant 0 : i32
    %c0_i32_1 = arith.constant 0 : i32
    return %arg1, %c0_i32, %c0_i32_0 : i32, i32, i32
  }
  func.func @transform_3(%arg0: i32, %arg1: i32) -> (i32, i32, i32) {
    %c0_i32 = arith.constant 0 : i32
    %c0_i32_0 = arith.constant 0 : i32
    %c0_i32_1 = arith.constant 0 : i32
    return %arg1, %c0_i32, %c0_i32_0 : i32, i32, i32
  }
  func.func @transform_4(%arg0: i32, %arg1: i32) -> (i32, i32, i32) {
    %c0_i32 = arith.constant 0 : i32
    %c0_i32_0 = arith.constant 0 : i32
    %c0_i32_1 = arith.constant 0 : i32
    return %arg1, %c0_i32, %c0_i32_0 : i32, i32, i32
  }
  func.func @transform_5(%arg0: i32, %arg1: i32) -> (i32, i32, i32) {
    %c0_i32 = arith.constant 0 : i32
    %c0_i32_0 = arith.constant 0 : i32
    %c0_i32_1 = arith.constant 0 : i32
    return %arg1, %c0_i32, %c0_i32_0 : i32, i32, i32
  }
  func.func @transform_6(%arg0: i32, %arg1: i32) -> (i32, i32, i32) {
    %c0_i32 = arith.constant 0 : i32
    %c0_i32_0 = arith.constant 0 : i32
    %c0_i32_1 = arith.constant 0 : i32
    return %arg1, %c0_i32, %c0_i32_0 : i32, i32, i32
  }
  func.func @transform_7(%arg0: i32, %arg1: i32) -> (i32, i32, i32) {
    %c0_i32 = arith.constant 0 : i32
    %c0_i32_0 = arith.constant 0 : i32
    %c0_i32_1 = arith.constant 0 : i32
    return %arg1, %c0_i32, %c0_i32_0 : i32, i32, i32
  }
  func.func @transform_8(%arg0: i32, %arg1: i32) -> (i32, i32, i32) {
    %c0_i32 = arith.constant 0 : i32
    %c0_i32_0 = arith.constant 0 : i32
    %c0_i32_1 = arith.constant 0 : i32
    return %arg1, %c0_i32, %c0_i32_0 : i32, i32, i32
  }
  func.func @transform_9(%arg0: i32, %arg1: i32) -> (i32, i32, i32) {
    %c0_i32 = arith.constant 0 : i32
    %c0_i32_0 = arith.constant 0 : i32
    %c0_i32_1 = arith.constant 0 : i32
    return %arg1, %c0_i32, %c0_i32_0 : i32, i32, i32
  }
  func.func @transform_10(%arg0: i32, %arg1: i32) -> (i32, i32, i32) {
    %c0_i32 = arith.constant 0 : i32
    %c0_i32_0 = arith.constant 0 : i32
    %c0_i32_1 = arith.constant 0 : i32
    return %arg1, %c0_i32, %c0_i32_0 : i32, i32, i32
  }
  func.func @transform_11(%arg0: i32, %arg1: i32) -> (i32, i32, i32) {
    %c0_i32 = arith.constant 0 : i32
    %c0_i32_0 = arith.constant 0 : i32
    %c0_i32_1 = arith.constant 0 : i32
    return %arg1, %c0_i32, %c0_i32_0 : i32, i32, i32
  }
  func.func @transform_12(%arg0: i32, %arg1: i32) -> (i32, i32, i32) {
    %c0_i32 = arith.constant 0 : i32
    %c0_i32_0 = arith.constant 0 : i32
    %c0_i32_1 = arith.constant 0 : i32
    return %arg1, %c0_i32, %c0_i32_0 : i32, i32, i32
  }
  func.func @transform_13(%arg0: i32, %arg1: i32) -> (i32, i32, i32) {
    %c0_i32 = arith.constant 0 : i32
    %c0_i32_0 = arith.constant 0 : i32
    %c0_i32_1 = arith.constant 0 : i32
    return %arg1, %c0_i32, %c0_i32_0 : i32, i32, i32
  }
  func.func @transform_14(%arg0: i32, %arg1: i32) -> (i32, i32) {
    %c0_i32 = arith.constant 0 : i32
    %c0_i32_0 = arith.constant 0 : i32
    %c0_i32_1 = arith.constant 0 : i32
    return %c0_i32, %c0_i32_0 : i32, i32
  }
  func.func @transform_15(%arg0: i32, %arg1: i32) -> (i32, i32) {
    %c0_i32 = arith.constant 0 : i32
    %c0_i32_0 = arith.constant 0 : i32
    %c0_i32_1 = arith.constant 0 : i32
    return %c0_i32, %c0_i32_0 : i32, i32
  }
  func.func @transform_16(%arg0: i32, %arg1: i32) -> (i32, i32, i32) {
    %c0_i32 = arith.constant 0 : i32
    %c0_i32_0 = arith.constant 0 : i32
    %c0_i32_1 = arith.constant 0 : i32
    return %arg0, %c0_i32, %c0_i32_0 : i32, i32, i32
  }
}

</mosaic_0001>

<llo_original>
// kernel: tpu_custom_call.1
$region0: #{tpu_custom_call.1}
  #allocation0 [shape = 'u32[]', space=smem, size = 0x4, offset = 0x4, fixed_abs, tag = 'smem constant byte address 0x4 - core index']
  #allocation1 [shape = 'u32[144,128]{1,0:T(1,128)}', space=vmem, size = 0x12000, scoped, tag = 'internal scratch']
  #allocation2 [shape = 'f32[16,32]{1,0:T(8,128)}', space=vmem, size = 0x2000, scoped, tag = 'scratch operand']
  %s0 = inlined_call_operand.hbm [shape: f32[2,8,32], index: 0, kind: input, shape index: {}]
  %s1 = inlined_call_operand.hbm [shape: f32[2,1,8], index: 1, kind: input, shape index: {}]
  %s2 = inlined_call_operand.vmem [shape: f32[2,1,32], index: 2, kind: input, shape index: {}]
  %s3 = inlined_call_operand.vmem [shape: f32[2,1,32], index: 3, kind: input, shape index: {}]
  %s4 = inlined_call_operand.vmem [shape: bf16[2,32,96], index: 4, kind: input, shape index: {}]
  %s5 = inlined_call_operand.vmem [shape: f32[2,1,96], index: 5, kind: input, shape index: {}]
  %s6 = inlined_call_operand.vmem [shape: bf16[2,32,32], index: 6, kind: input, shape index: {}]
  %s7 = inlined_call_operand.vmem [shape: f32[2,1,32], index: 7, kind: input, shape index: {}]
  %s8 = inlined_call_operand.vmem [shape: f32[2,1,32], index: 8, kind: input, shape index: {}]
  %s9 = inlined_call_operand.vmem [shape: f32[2,1,32], index: 9, kind: input, shape index: {}]
  %s10 = inlined_call_operand.vmem [shape: bf16[2,32,64], index: 10, kind: input, shape index: {}]
  %s11 = inlined_call_operand.vmem [shape: f32[2,1,64], index: 11, kind: input, shape index: {}]
  %s12 = inlined_call_operand.vmem [shape: bf16[2,64,32], index: 12, kind: input, shape index: {}]
  %s13 = inlined_call_operand.vmem [shape: f32[2,1,32], index: 13, kind: input, shape index: {}]
  %s14 = inlined_call_operand.vmem [shape: f32[1,32], index: 14, kind: input, shape index: {}]
  %s15 = inlined_call_operand.vmem [shape: f32[1,32], index: 15, kind: input, shape index: {}]
  %s16 = inlined_call_operand.hbm [shape: f32[2,8,32], index: 16, kind: output, shape index: {}]
  %s17 = sld [smem:[#allocation0]]
  $region113: #{tpu_custom_call.1} parent=0
    _
  %s19 = ssub.s32 1, %s17
  %s20 = scalar_select 0, %s19, %s17
  $region1: #{tpu_custom_call.1} parent=0
    #allocation3 [shape = 'u8[8192]{0}', space=vmem, size = 0x2000, scoped, tag = 'input window, operand 0, single buffered']
    #allocation4 [shape = 's32[2]{0}', space=sflag, size = 0x8, scoped, tag = 'scoped memory for tpu_custom_call.1']
    #allocation5 [shape = 's32[2]{0}', space=sflag, size = 0x8, scoped, tag = 'scoped memory for tpu_custom_call.1']
    #allocation6 [shape = 'u8[1024]{0}', space=vmem, size = 0x400, scoped, tag = 'input window, operand 1, single buffered']
    #allocation7 [shape = 's32[1]{0}', space=sflag, size = 0x4, scoped, tag = 'scoped memory for tpu_custom_call.1']
    #allocation8 [shape = 'u8[8192]{0}', space=vmem, size = 0x2000, scoped, tag = 'output window, operand 0, single buffered']
    %21 = vsyncpa [#allocation4], 0
    %22 = vsyncpa [#allocation7], 0
    %23 = vsyncpa [#allocation5], 0
    loop: start=0, step=1, limit=4
    $region2: #{tpu_custom_call.1} parent=1 // loop_pre_header
      _
    $region3: #{tpu_custom_call.1} parent=1 // loop_header
      %s25 = sphi 0, %s29
      %p26 = scmp.ge.s32.totalorder %s25, 4
      %s32 = sphi 0, %s44
      %s33 = sphi 0, %s40
      %s34 = sphi 0, %s32
      %s35 = sphi 0, %s33
      %s36 = sphi 0, %s34
      %s37 = sphi 0, %s35
      %s47 = sphi 0, %s49
      %s50 = sphi 0, %s47
      %s51 = sphi 0, %s50
      %s67 = sphi 0, %s51
      %s73 = sphi 0, %s75
      %s76 = sphi 0, %s73
      %s77 = sphi 0, %s76
      %s93 = sphi 0, %s77
      %s99 = sphi 0, %s101
      %s102 = sphi 0, %s99
      %s103 = sphi 0, %s102
      %s119 = sphi 0, %s103
      %s125 = sphi 0, %s127
      %s128 = sphi 0, %s125
      %s129 = sphi 0, %s128
      %s145 = sphi 0, %s129
      %s151 = sphi 0, %s153
      %s154 = sphi 0, %s151
      %s155 = sphi 0, %s154
      %s171 = sphi 0, %s155
      %s177 = sphi 0, %s179
      %s180 = sphi 0, %s177
      %s181 = sphi 0, %s180
      %s197 = sphi 0, %s181
      %s203 = sphi 0, %s205
      %s206 = sphi 0, %s203
      %s207 = sphi 0, %s206
      %s223 = sphi 0, %s207
      %s229 = sphi 0, %s231
      %s232 = sphi 0, %s229
      %s233 = sphi 0, %s232
      %s249 = sphi 0, %s233
      %s255 = sphi 0, %s257
      %s258 = sphi 0, %s255
      %s259 = sphi 0, %s258
      %s275 = sphi 0, %s259
      %s281 = sphi 0, %s283
      %s284 = sphi 0, %s281
      %s285 = sphi 0, %s284
      %s301 = sphi 0, %s285
      %s307 = sphi 0, %s309
      %s310 = sphi 0, %s307
      %s311 = sphi 0, %s310
      %s327 = sphi 0, %s311
      %s333 = sphi 0, %s335
      %s336 = sphi 0, %s333
      %s337 = sphi 0, %s336
      %s353 = sphi 0, %s337
      %s359 = sphi 0, %s361
      %s362 = sphi 0, %s359
      %s363 = sphi 0, %s362
      %s379 = sphi 0, %s363
      %s385 = sphi 0, %s387
      %s388 = sphi 0, %s385
      %s389 = sphi 0, %s388
      %s405 = sphi 0, %s389
      %s409 = sphi 0, %s409
      %s411 = sphi 0, %s409
      %s412 = sphi 0, %s411
      %s426 = sphi 0, %s412
      %s430 = sphi 0, %s430
      %s432 = sphi 0, %s430
      %s433 = sphi 0, %s432
      %s447 = sphi 0, %s433
      %s453 = sphi 0, %s455
      %s456 = sphi 0, %s453
      %s457 = sphi 0, %s456
      %s473 = sphi 0, %s457
    $region4: #{tpu_custom_call.1} parent=1 // loop_header_branch
      %28 = sbr.rel (%p26) target = $region8
    $region5: #{tpu_custom_call.1} parent=1 // loop_body
      %s30 = ssub.s32 %s25, 1
      %s31 = ssub.s32 %s25, 2
      %s38 = sadd.s32 1, %s33
      %p39 = scmp.ge.s32.totalorder %s38, 2
      %s40 = scalar_select %p39, 0, %s38
      %s41 = sadd.s32 1, %s32
      %s42 = scalar_select %p39, %s41, %s32
      %p43 = scmp.ge.s32.totalorder %s42, 1
      %s44 = scalar_select %p43, 0, %s42
      %s45 = ssub.s32 %s32, %s44
      %p46 = scmp.eq.s32.totalorder %s45, 0
      %s48 = sadd.s32 %s47, 1
      %s49 = scalar_select %p46, %s47, %s48
      %p52 = pneg %p46
      %p53 = scmp.eq.s32.totalorder %s25, 1
      %p54 = por %p52, %p53
      %p55 = scmp.ne.s32.totalorder %s47, %s50
      %p56 = scmp.eq.s32.totalorder %s25, 0
      %p57 = por %p55, %p56
      %p58 = scmp.ne.s32.totalorder %s47, %s50
      %p59 = scmp.eq.s32.totalorder %s30, 1
      %p60 = por %p58, %p59
      %p61 = scmp.ne.s32.totalorder %s50, %s51
      %p62 = scmp.eq.s32.totalorder %s30, 0
      %p63 = por %p61, %p62
      %p64 = scmp.ne.s32.totalorder %s50, %s51
      %p65 = scmp.eq.s32.totalorder %s31, 1
      %p66 = por %p64, %p65
      %p68 = scmp.ne.s32.totalorder %s51, %s67
      %p69 = scmp.eq.s32.totalorder %s31, 0
      %p70 = por %p68, %p69
      %s71 = ssub.s32 %s32, %s44
      %p72 = scmp.eq.s32.totalorder %s71, 0
      %s74 = sadd.s32 %s73, 1
      %s75 = scalar_select %p72, %s73, %s74
      %p78 = pneg %p72
      %p79 = scmp.eq.s32.totalorder %s25, 1
      %p80 = por %p78, %p79
      %p81 = scmp.ne.s32.totalorder %s73, %s76
      %p82 = scmp.eq.s32.totalorder %s25, 0
      %p83 = por %p81, %p82
      %p84 = scmp.ne.s32.totalorder %s73, %s76
      %p85 = scmp.eq.s32.totalorder %s30, 1
      %p86 = por %p84, %p85
      %p87 = scmp.ne.s32.totalorder %s76, %s77
      %p88 = scmp.eq.s32.totalorder %s30, 0
      %p89 = por %p87, %p88
      %p90 = scmp.ne.s32.totalorder %s76, %s77
      %p91 = scmp.eq.s32.totalorder %s31, 1
      %p92 = por %p90, %p91
      %p94 = scmp.ne.s32.totalorder %s77, %s93
      %p95 = scmp.eq.s32.totalorder %s31, 0
      %p96 = por %p94, %p95
      %s97 = ssub.s32 %s33, %s40
      %p98 = scmp.eq.s32.totalorder %s97, 0
      %s100 = sadd.s32 %s99, 1
      %s101 = scalar_select %p98, %s99, %s100
      %p104 = pneg %p98
      %p105 = scmp.eq.s32.totalorder %s25, 1
      %p106 = por %p104, %p105
      %p107 = scmp.ne.s32.totalorder %s99, %s102
      %p108 = scmp.eq.s32.totalorder %s25, 0
      %p109 = por %p107, %p108
      %p110 = scmp.ne.s32.totalorder %s99, %s102
      %p111 = scmp.eq.s32.totalorder %s30, 1
      %p112 = por %p110, %p111
      %p113 = scmp.ne.s32.totalorder %s102, %s103
      %p114 = scmp.eq.s32.totalorder %s30, 0
      %p115 = por %p113, %p114
      %p116 = scmp.ne.s32.totalorder %s102, %s103
      %p117 = scmp.eq.s32.totalorder %s31, 1
      %p118 = por %p116, %p117
      %p120 = scmp.ne.s32.totalorder %s103, %s119
      %p121 = scmp.eq.s32.totalorder %s31, 0
      %p122 = por %p120, %p121
      %s123 = ssub.s32 %s33, %s40
      %p124 = scmp.eq.s32.totalorder %s123, 0
      %s126 = sadd.s32 %s125, 1
      %s127 = scalar_select %p124, %s125, %s126
      %p130 = pneg %p124
      %p131 = scmp.eq.s32.totalorder %s25, 1
      %p132 = por %p130, %p131
      %p133 = scmp.ne.s32.totalorder %s125, %s128
      %p134 = scmp.eq.s32.totalorder %s25, 0
      %p135 = por %p133, %p134
      %p136 = scmp.ne.s32.totalorder %s125, %s128
      %p137 = scmp.eq.s32.totalorder %s30, 1
      %p138 = por %p136, %p137
      %p139 = scmp.ne.s32.totalorder %s128, %s129
      %p140 = scmp.eq.s32.totalorder %s30, 0
      %p141 = por %p139, %p140
      %p142 = scmp.ne.s32.totalorder %s128, %s129
      %p143 = scmp.eq.s32.totalorder %s31, 1
      %p144 = por %p142, %p143
      %p146 = scmp.ne.s32.totalorder %s129, %s145
      %p147 = scmp.eq.s32.totalorder %s31, 0
      %p148 = por %p146, %p147
      %s149 = ssub.s32 %s33, %s40
      %p150 = scmp.eq.s32.totalorder %s149, 0
      %s152 = sadd.s32 %s151, 1
      %s153 = scalar_select %p150, %s151, %s152
      %p156 = pneg %p150
      %p157 = scmp.eq.s32.totalorder %s25, 1
      %p158 = por %p156, %p157
      %p159 = scmp.ne.s32.totalorder %s151, %s154
      %p160 = scmp.eq.s32.totalorder %s25, 0
      %p161 = por %p159, %p160
      %p162 = scmp.ne.s32.totalorder %s151, %s154
      %p163 = scmp.eq.s32.totalorder %s30, 1
      %p164 = por %p162, %p163
      %p165 = scmp.ne.s32.totalorder %s154, %s155
      %p166 = scmp.eq.s32.totalorder %s30, 0
      %p167 = por %p165, %p166
      %p168 = scmp.ne.s32.totalorder %s154, %s155
      %p169 = scmp.eq.s32.totalorder %s31, 1
      %p170 = por %p168, %p169
      %p172 = scmp.ne.s32.totalorder %s155, %s171
      %p173 = scmp.eq.s32.totalorder %s31, 0
      %p174 = por %p172, %p173
      %s175 = ssub.s32 %s33, %s40
      %p176 = scmp.eq.s32.totalorder %s175, 0
      %s178 = sadd.s32 %s177, 1
      %s179 = scalar_select %p176, %s177, %s178
      %p182 = pneg %p176
      %p183 = scmp.eq.s32.totalorder %s25, 1
      %p184 = por %p182, %p183
      %p185 = scmp.ne.s32.totalorder %s177, %s180
      %p186 = scmp.eq.s32.totalorder %s25, 0
      %p187 = por %p185, %p186
      %p188 = scmp.ne.s32.totalorder %s177, %s180
      %p189 = scmp.eq.s32.totalorder %s30, 1
      %p190 = por %p188, %p189
      %p191 = scmp.ne.s32.totalorder %s180, %s181
      %p192 = scmp.eq.s32.totalorder %s30, 0
      %p193 = por %p191, %p192
      %p194 = scmp.ne.s32.totalorder %s180, %s181
      %p195 = scmp.eq.s32.totalorder %s31, 1
      %p196 = por %p194, %p195
      %p198 = scmp.ne.s32.totalorder %s181, %s197
      %p199 = scmp.eq.s32.totalorder %s31, 0
      %p200 = por %p198, %p199
      %s201 = ssub.s32 %s33, %s40
      %p202 = scmp.eq.s32.totalorder %s201, 0
      %s204 = sadd.s32 %s203, 1
      %s205 = scalar_select %p202, %s203, %s204
      %p208 = pneg %p202
      %p209 = scmp.eq.s32.totalorder %s25, 1
      %p210 = por %p208, %p209
      %p211 = scmp.ne.s32.totalorder %s203, %s206
      %p212 = scmp.eq.s32.totalorder %s25, 0
      %p213 = por %p211, %p212
      %p214 = scmp.ne.s32.totalorder %s203, %s206
      %p215 = scmp.eq.s32.totalorder %s30, 1
      %p216 = por %p214, %p215
      %p217 = scmp.ne.s32.totalorder %s206, %s207
      %p218 = scmp.eq.s32.totalorder %s30, 0
      %p219 = por %p217, %p218
      %p220 = scmp.ne.s32.totalorder %s206, %s207
      %p221 = scmp.eq.s32.totalorder %s31, 1
      %p222 = por %p220, %p221
      %p224 = scmp.ne.s32.totalorder %s207, %s223
      %p225 = scmp.eq.s32.totalorder %s31, 0
      %p226 = por %p224, %p225
      %s227 = ssub.s32 %s33, %s40
      %p228 = scmp.eq.s32.totalorder %s227, 0
      %s230 = sadd.s32 %s229, 1
      %s231 = scalar_select %p228, %s229, %s230
      %p234 = pneg %p228
      %p235 = scmp.eq.s32.totalorder %s25, 1
      %p236 = por %p234, %p235
      %p237 = scmp.ne.s32.totalorder %s229, %s232
      %p238 = scmp.eq.s32.totalorder %s25, 0
      %p239 = por %p237, %p238
      %p240 = scmp.ne.s32.totalorder %s229, %s232
      %p241 = scmp.eq.s32.totalorder %s30, 1
      %p242 = por %p240, %p241
      %p243 = scmp.ne.s32.totalorder %s232, %s233
      %p244 = scmp.eq.s32.totalorder %s30, 0
      %p245 = por %p243, %p244
      %p246 = scmp.ne.s32.totalorder %s232, %s233
      %p247 = scmp.eq.s32.totalorder %s31, 1
      %p248 = por %p246, %p247
      %p250 = scmp.ne.s32.totalorder %s233, %s249
      %p251 = scmp.eq.s32.totalorder %s31, 0
      %p252 = por %p250, %p251
      %s253 = ssub.s32 %s33, %s40
      %p254 = scmp.eq.s32.totalorder %s253, 0
      %s256 = sadd.s32 %s255, 1
      %s257 = scalar_select %p254, %s255, %s256
      %p260 = pneg %p254
      %p261 = scmp.eq.s32.totalorder %s25, 1
      %p262 = por %p260, %p261
      %p263 = scmp.ne.s32.totalorder %s255, %s258
      %p264 = scmp.eq.s32.totalorder %s25, 0
      %p265 = por %p263, %p264
      %p266 = scmp.ne.s32.totalorder %s255, %s258
      %p267 = scmp.eq.s32.totalorder %s30, 1
      %p268 = por %p266, %p267
      %p269 = scmp.ne.s32.totalorder %s258, %s259
      %p270 = scmp.eq.s32.totalorder %s30, 0
      %p271 = por %p269, %p270
      %p272 = scmp.ne.s32.totalorder %s258, %s259
      %p273 = scmp.eq.s32.totalorder %s31, 1
      %p274 = por %p272, %p273
      %p276 = scmp.ne.s32.totalorder %s259, %s275
      %p277 = scmp.eq.s32.totalorder %s31, 0
      %p278 = por %p276, %p277
      %s279 = ssub.s32 %s33, %s40
      %p280 = scmp.eq.s32.totalorder %s279, 0
      %s282 = sadd.s32 %s281, 1
      %s283 = scalar_select %p280, %s281, %s282
      %p286 = pneg %p280
      %p287 = scmp.eq.s32.totalorder %s25, 1
      %p288 = por %p286, %p287
      %p289 = scmp.ne.s32.totalorder %s281, %s284
      %p290 = scmp.eq.s32.totalorder %s25, 0
      %p291 = por %p289, %p290
      %p292 = scmp.ne.s32.totalorder %s281, %s284
      %p293 = scmp.eq.s32.totalorder %s30, 1
      %p294 = por %p292, %p293
      %p295 = scmp.ne.s32.totalorder %s284, %s285
      %p296 = scmp.eq.s32.totalorder %s30, 0
      %p297 = por %p295, %p296
      %p298 = scmp.ne.s32.totalorder %s284, %s285
      %p299 = scmp.eq.s32.totalorder %s31, 1
      %p300 = por %p298, %p299
      %p302 = scmp.ne.s32.totalorder %s285, %s301
      %p303 = scmp.eq.s32.totalorder %s31, 0
      %p304 = por %p302, %p303
      %s305 = ssub.s32 %s33, %s40
      %p306 = scmp.eq.s32.totalorder %s305, 0
      %s308 = sadd.s32 %s307, 1
      %s309 = scalar_select %p306, %s307, %s308
      %p312 = pneg %p306
      %p313 = scmp.eq.s32.totalorder %s25, 1
      %p314 = por %p312, %p313
      %p315 = scmp.ne.s32.totalorder %s307, %s310
      %p316 = scmp.eq.s32.totalorder %s25, 0
      %p317 = por %p315, %p316
      %p318 = scmp.ne.s32.totalorder %s307, %s310
      %p319 = scmp.eq.s32.totalorder %s30, 1
      %p320 = por %p318, %p319
      %p321 = scmp.ne.s32.totalorder %s310, %s311
      %p322 = scmp.eq.s32.totalorder %s30, 0
      %p323 = por %p321, %p322
      %p324 = scmp.ne.s32.totalorder %s310, %s311
      %p325 = scmp.eq.s32.totalorder %s31, 1
      %p326 = por %p324, %p325
      %p328 = scmp.ne.s32.totalorder %s311, %s327
      %p329 = scmp.eq.s32.totalorder %s31, 0
      %p330 = por %p328, %p329
      %s331 = ssub.s32 %s33, %s40
      %p332 = scmp.eq.s32.totalorder %s331, 0
      %s334 = sadd.s32 %s333, 1
      %s335 = scalar_select %p332, %s333, %s334
      %p338 = pneg %p332
      %p339 = scmp.eq.s32.totalorder %s25, 1
      %p340 = por %p338, %p339
      %p341 = scmp.ne.s32.totalorder %s333, %s336
      %p342 = scmp.eq.s32.totalorder %s25, 0
      %p343 = por %p341, %p342
      %p344 = scmp.ne.s32.totalorder %s333, %s336
      %p345 = scmp.eq.s32.totalorder %s30, 1
      %p346 = por %p344, %p345
      %p347 = scmp.ne.s32.totalorder %s336, %s337
      %p348 = scmp.eq.s32.totalorder %s30, 0
      %p349 = por %p347, %p348
      %p350 = scmp.ne.s32.totalorder %s336, %s337
      %p351 = scmp.eq.s32.totalorder %s31, 1
      %p352 = por %p350, %p351
      %p354 = scmp.ne.s32.totalorder %s337, %s353
      %p355 = scmp.eq.s32.totalorder %s31, 0
      %p356 = por %p354, %p355
      %s357 = ssub.s32 %s33, %s40
      %p358 = scmp.eq.s32.totalorder %s357, 0
      %s360 = sadd.s32 %s359, 1
      %s361 = scalar_select %p358, %s359, %s360
      %p364 = pneg %p358
      %p365 = scmp.eq.s32.totalorder %s25, 1
      %p366 = por %p364, %p365
      %p367 = scmp.ne.s32.totalorder %s359, %s362
      %p368 = scmp.eq.s32.totalorder %s25, 0
      %p369 = por %p367, %p368
      %p370 = scmp.ne.s32.totalorder %s359, %s362
      %p371 = scmp.eq.s32.totalorder %s30, 1
      %p372 = por %p370, %p371
      %p373 = scmp.ne.s32.totalorder %s362, %s363
      %p374 = scmp.eq.s32.totalorder %s30, 0
      %p375 = por %p373, %p374
      %p376 = scmp.ne.s32.totalorder %s362, %s363
      %p377 = scmp.eq.s32.totalorder %s31, 1
      %p378 = por %p376, %p377
      %p380 = scmp.ne.s32.totalorder %s363, %s379
      %p381 = scmp.eq.s32.totalorder %s31, 0
      %p382 = por %p380, %p381
      %s383 = ssub.s32 %s33, %s40
      %p384 = scmp.eq.s32.totalorder %s383, 0
      %s386 = sadd.s32 %s385, 1
      %s387 = scalar_select %p384, %s385, %s386
      %p390 = pneg %p384
      %p391 = scmp.eq.s32.totalorder %s25, 1
      %p392 = por %p390, %p391
      %p393 = scmp.ne.s32.totalorder %s385, %s388
      %p394 = scmp.eq.s32.totalorder %s25, 0
      %p395 = por %p393, %p394
      %p396 = scmp.ne.s32.totalorder %s385, %s388
      %p397 = scmp.eq.s32.totalorder %s30, 1
      %p398 = por %p396, %p397
      %p399 = scmp.ne.s32.totalorder %s388, %s389
      %p400 = scmp.eq.s32.totalorder %s30, 0
      %p401 = por %p399, %p400
      %p402 = scmp.ne.s32.totalorder %s388, %s389
      %p403 = scmp.eq.s32.totalorder %s31, 1
      %p404 = por %p402, %p403
      %p406 = scmp.ne.s32.totalorder %s389, %s405
      %p407 = scmp.eq.s32.totalorder %s31, 0
      %p408 = por %p406, %p407
      %s410 = sadd.s32 %s409, 1
      %p413 = scmp.eq.s32.totalorder %s25, 1
      %p414 = scmp.ne.s32.totalorder %s409, %s411
      %p415 = scmp.eq.s32.totalorder %s25, 0
      %p416 = por %p414, %p415
      %p417 = scmp.ne.s32.totalorder %s409, %s411
      %p418 = scmp.eq.s32.totalorder %s30, 1
      %p419 = por %p417, %p418
      %p420 = scmp.ne.s32.totalorder %s411, %s412
      %p421 = scmp.eq.s32.totalorder %s30, 0
      %p422 = por %p420, %p421
      %p423 = scmp.ne.s32.totalorder %s411, %s412
      %p424 = scmp.eq.s32.totalorder %s31, 1
      %p425 = por %p423, %p424
      %p427 = scmp.ne.s32.totalorder %s412, %s426
      %p428 = scmp.eq.s32.totalorder %s31, 0
      %p429 = por %p427, %p428
      %s431 = sadd.s32 %s430, 1
      %p434 = scmp.eq.s32.totalorder %s25, 1
      %p435 = scmp.ne.s32.totalorder %s430, %s432
      %p436 = scmp.eq.s32.totalorder %s25, 0
      %p437 = por %p435, %p436
      %p438 = scmp.ne.s32.totalorder %s430, %s432
      %p439 = scmp.eq.s32.totalorder %s30, 1
      %p440 = por %p438, %p439
      %p441 = scmp.ne.s32.totalorder %s432, %s433
      %p442 = scmp.eq.s32.totalorder %s30, 0
      %p443 = por %p441, %p442
      %p444 = scmp.ne.s32.totalorder %s432, %s433
      %p445 = scmp.eq.s32.totalorder %s31, 1
      %p446 = por %p444, %p445
      %p448 = scmp.ne.s32.totalorder %s433, %s447
      %p449 = scmp.eq.s32.totalorder %s31, 0
      %p450 = por %p448, %p449
      %s451 = ssub.s32 %s32, %s44
      %p452 = scmp.eq.s32.totalorder %s451, 0
      %s454 = sadd.s32 %s453, 1
      %s455 = scalar_select %p452, %s453, %s454
      %p458 = pneg %p452
      %p459 = scmp.eq.s32.totalorder %s25, 1
      %p460 = por %p458, %p459
      %p461 = scmp.ne.s32.totalorder %s453, %s456
      %p462 = scmp.eq.s32.totalorder %s25, 0
      %p463 = por %p461, %p462
      %p464 = scmp.ne.s32.totalorder %s453, %s456
      %p465 = scmp.eq.s32.totalorder %s30, 1
      %p466 = por %p464, %p465
      %p467 = scmp.ne.s32.totalorder %s456, %s457
      %p468 = scmp.eq.s32.totalorder %s30, 0
      %p469 = por %p467, %p468
      %p470 = scmp.ne.s32.totalorder %s456, %s457
      %p471 = scmp.eq.s32.totalorder %s31, 1
      %p472 = por %p470, %p471
      %p474 = scmp.ne.s32.totalorder %s457, %s473
      %p475 = scmp.eq.s32.totalorder %s31, 0
      %p476 = por %p474, %p475
      %p477 = scmp.le.s32.totalorder 1, %s25
      %p478 = scmp.lt.s32.totalorder %s25, 3
      %p479 = pnand %p477, %p478
      %p480 = pneg %p479
      // Predicated region
      $region9: #{tpu_custom_call.1} parent=5 // pred_check
        _
      $region10: #{tpu_custom_call.1} parent=5 // pred_check_branch
        %482 = sbr.rel (%p479) target = $region12
      $region11: #{tpu_custom_call.1} parent=5 // pred_region
        %s483 = ssub.s32 %s25, 1
        // Predicated region
        $region13: #{tpu_custom_call.1} parent=11 // pred_check
          %p484 = pneg %p63
        $region14: #{tpu_custom_call.1} parent=11 // pred_check_branch
          %486 = sbr.rel (%p484) target = $region16
        $region15: #{tpu_custom_call.1} parent=11 // pred_region
          %s487 = smul.u32 2, %s34
          %s489 = ssub.s32 256, 256
          %490 = vsyncadd [#allocation4], %s489
          %s491 = smul.addr %s487, 128
          %s492 = scalar_lea.hbm %s0, %s491
          %s493 = sshll.u32 [#allocation3], 4
          %s494 = int_to_ptr.vmem [resolvable:$true] %s493
          %499 = dma.hbm_to_vmem [thread:$0]  %s492, 256, %s494, [#allocation4], 128, 128, 8
        $region16: #{tpu_custom_call.1} parent=11 // pred_fallthru
          _
        // Predicated region
        $region17: #{tpu_custom_call.1} parent=11 // pred_check
          %p500 = pneg %p89
        $region18: #{tpu_custom_call.1} parent=11 // pred_check_branch
          %502 = sbr.rel (%p500) target = $region20
        $region19: #{tpu_custom_call.1} parent=11 // pred_region
          %s503 = smul.u32 2, %s34
          %s505 = ssub.s32 32, 32
          %506 = vsyncadd [#allocation7], %s505
          %s507 = smul.addr %s503, 16
          %s508 = scalar_lea.hbm %s1, %s507
          %s509 = sshll.u32 [#allocation6], 4
          %s510 = int_to_ptr.vmem [resolvable:$true] %s509
          %515 = dma.hbm_to_vmem [thread:$0]  %s508, 32, %s510, [#allocation7], 16, 16, 1
        $region20: #{tpu_custom_call.1} parent=11 // pred_fallthru
          _
        // Predicated region
        $region21: #{tpu_custom_call.1} parent=11 // pred_check
          %p516 = pneg %p422
        $region22: #{tpu_custom_call.1} parent=11 // pred_check_branch
          %518 = sbr.rel (%p516) target = $region24
        $region23: #{tpu_custom_call.1} parent=11 // pred_region
          _
        $region24: #{tpu_custom_call.1} parent=11 // pred_fallthru
          _
        // Predicated region
        $region25: #{tpu_custom_call.1} parent=11 // pred_check
          %p519 = pneg %p443
        $region26: #{tpu_custom_call.1} parent=11 // pred_check_branch
          %521 = sbr.rel (%p519) target = $region28
        $region27: #{tpu_custom_call.1} parent=11 // pred_region
          _
        $region28: #{tpu_custom_call.1} parent=11 // pred_fallthru
          _
      $region12: #{tpu_custom_call.1} parent=5 // pred_fallthru
        _
      %p522 = scmp.lt.s32.totalorder %s25, 2
      // Predicated region
      $region29: #{tpu_custom_call.1} parent=5 // pred_check
        %p523 = pneg %p522
      $region30: #{tpu_custom_call.1} parent=5 // pred_check_branch
        %525 = sbr.rel (%p523) target = $region32
      $region31: #{tpu_custom_call.1} parent=5 // pred_region
        // Predicated region
        $region33: #{tpu_custom_call.1} parent=31 // pred_check
          %p526 = pneg %p109
        $region34: #{tpu_custom_call.1} parent=31 // pred_check_branch
          %528 = sbr.rel (%p526) target = $region36
        $region35: #{tpu_custom_call.1} parent=31 // pred_region
          %p529 = scmp.lt.s32.totalorder %s33, 1
          %s530 = scalar_select %p529, %s33, 1
          %s531 = scalar_lea.vmem %s2, %s530
        $region36: #{tpu_custom_call.1} parent=31 // pred_fallthru
          _
        // Predicated region
        $region37: #{tpu_custom_call.1} parent=31 // pred_check
          %p532 = pneg %p135
        $region38: #{tpu_custom_call.1} parent=31 // pred_check_branch
          %534 = sbr.rel (%p532) target = $region40
        $region39: #{tpu_custom_call.1} parent=31 // pred_region
          %p535 = scmp.lt.s32.totalorder %s33, 1
          %s536 = scalar_select %p535, %s33, 1
          %s537 = scalar_lea.vmem %s3, %s536
        $region40: #{tpu_custom_call.1} parent=31 // pred_fallthru
          _
        // Predicated region
        $region41: #{tpu_custom_call.1} parent=31 // pred_check
          %p538 = pneg %p161
        $region42: #{tpu_custom_call.1} parent=31 // pred_check_branch
          %540 = sbr.rel (%p538) target = $region44
        $region43: #{tpu_custom_call.1} parent=31 // pred_region
          %p541 = scmp.lt.s32.totalorder %s33, 1
          %s542 = scalar_select %p541, %s33, 1
          %s543 = smul.addr %s542, 4
          %s544 = smul.addr %s543, 4
          %s545 = scalar_lea.vmem %s4, %s544
        $region44: #{tpu_custom_call.1} parent=31 // pred_fallthru
          _
        // Predicated region
        $region45: #{tpu_custom_call.1} parent=31 // pred_check
          %p546 = pneg %p187
        $region46: #{tpu_custom_call.1} parent=31 // pred_check_branch
          %548 = sbr.rel (%p546) target = $region48
        $region47: #{tpu_custom_call.1} parent=31 // pred_region
          %p549 = scmp.lt.s32.totalorder %s33, 1
          %s550 = scalar_select %p549, %s33, 1
          %s551 = scalar_lea.vmem %s5, %s550
        $region48: #{tpu_custom_call.1} parent=31 // pred_fallthru
          _
        // Predicated region
        $region49: #{tpu_custom_call.1} parent=31 // pred_check
          %p552 = pneg %p213
        $region50: #{tpu_custom_call.1} parent=31 // pred_check_branch
          %554 = sbr.rel (%p552) target = $region52
        $region51: #{tpu_custom_call.1} parent=31 // pred_region
          %p555 = scmp.lt.s32.totalorder %s33, 1
          %s556 = scalar_select %p555, %s33, 1
          %s557 = smul.addr %s556, 4
          %s558 = smul.addr %s557, 4
          %s559 = scalar_lea.vmem %s6, %s558
        $region52: #{tpu_custom_call.1} parent=31 // pred_fallthru
          _
        // Predicated region
        $region53: #{tpu_custom_call.1} parent=31 // pred_check
          %p560 = pneg %p239
        $region54: #{tpu_custom_call.1} parent=31 // pred_check_branch
          %562 = sbr.rel (%p560) target = $region56
        $region55: #{tpu_custom_call.1} parent=31 // pred_region
          %p563 = scmp.lt.s32.totalorder %s33, 1
          %s564 = scalar_select %p563, %s33, 1
          %s565 = scalar_lea.vmem %s7, %s564
        $region56: #{tpu_custom_call.1} parent=31 // pred_fallthru
          _
        // Predicated region
        $region57: #{tpu_custom_call.1} parent=31 // pred_check
          %p566 = pneg %p265
        $region58: #{tpu_custom_call.1} parent=31 // pred_check_branch
          %568 = sbr.rel (%p566) target = $region60
        $region59: #{tpu_custom_call.1} parent=31 // pred_region
          %p569 = scmp.lt.s32.totalorder %s33, 1
          %s570 = scalar_select %p569, %s33, 1
          %s571 = scalar_lea.vmem %s8, %s570
        $region60: #{tpu_custom_call.1} parent=31 // pred_fallthru
          _
        // Predicated region
        $region61: #{tpu_custom_call.1} parent=31 // pred_check
          %p572 = pneg %p291
        $region62: #{tpu_custom_call.1} parent=31 // pred_check_branch
          %574 = sbr.rel (%p572) target = $region64
        $region63: #{tpu_custom_call.1} parent=31 // pred_region
          %p575 = scmp.lt.s32.totalorder %s33, 1
          %s576 = scalar_select %p575, %s33, 1
          %s577 = scalar_lea.vmem %s9, %s576
        $region64: #{tpu_custom_call.1} parent=31 // pred_fallthru
          _
        // Predicated region
        $region65: #{tpu_custom_call.1} parent=31 // pred_check
          %p578 = pneg %p317
        $region66: #{tpu_custom_call.1} parent=31 // pred_check_branch
          %580 = sbr.rel (%p578) target = $region68
        $region67: #{tpu_custom_call.1} parent=31 // pred_region
          %p581 = scmp.lt.s32.totalorder %s33, 1
          %s582 = scalar_select %p581, %s33, 1
          %s583 = smul.addr %s582, 4
          %s584 = smul.addr %s583, 4
          %s585 = scalar_lea.vmem %s10, %s584
        $region68: #{tpu_custom_call.1} parent=31 // pred_fallthru
          _
        // Predicated region
        $region69: #{tpu_custom_call.1} parent=31 // pred_check
          %p586 = pneg %p343
        $region70: #{tpu_custom_call.1} parent=31 // pred_check_branch
          %588 = sbr.rel (%p586) target = $region72
        $region71: #{tpu_custom_call.1} parent=31 // pred_region
          %p589 = scmp.lt.s32.totalorder %s33, 1
          %s590 = scalar_select %p589, %s33, 1
          %s591 = scalar_lea.vmem %s11, %s590
        $region72: #{tpu_custom_call.1} parent=31 // pred_fallthru
          _
        // Predicated region
        $region73: #{tpu_custom_call.1} parent=31 // pred_check
          %p592 = pneg %p369
        $region74: #{tpu_custom_call.1} parent=31 // pred_check_branch
          %594 = sbr.rel (%p592) target = $region76
        $region75: #{tpu_custom_call.1} parent=31 // pred_region
          %p595 = scmp.lt.s32.totalorder %s33, 1
          %s596 = scalar_select %p595, %s33, 1
          %s597 = smul.addr %s596, 8
          %s598 = smul.addr %s597, 4
          %s599 = scalar_lea.vmem %s12, %s598
        $region76: #{tpu_custom_call.1} parent=31 // pred_fallthru
          _
        // Predicated region
        $region77: #{tpu_custom_call.1} parent=31 // pred_check
          %p600 = pneg %p395
        $region78: #{tpu_custom_call.1} parent=31 // pred_check_branch
          %602 = sbr.rel (%p600) target = $region80
        $region79: #{tpu_custom_call.1} parent=31 // pred_region
          %p603 = scmp.lt.s32.totalorder %s33, 1
          %s604 = scalar_select %p603, %s33, 1
          %s605 = scalar_lea.vmem %s13, %s604
        $region80: #{tpu_custom_call.1} parent=31 // pred_fallthru
          _
      $region32: #{tpu_custom_call.1} parent=5 // pred_fallthru
        _
      %p606 = scmp.le.s32.totalorder 1, %s25
      %p607 = scmp.lt.s32.totalorder %s25, 3
      %p608 = pnand %p606, %p607
      %p609 = pneg %p608
      // Predicated region
      $region81: #{tpu_custom_call.1} parent=5 // pred_check
        _
      $region82: #{tpu_custom_call.1} parent=5 // pred_check_branch
        %611 = sbr.rel (%p608) target = $region84
      $region83: #{tpu_custom_call.1} parent=5 // pred_region
        %s612 = ssub.s32 %s25, 1
        // Predicated region
        $region85: #{tpu_custom_call.1} parent=83 // pred_check
          %p613 = pneg %p63
        $region86: #{tpu_custom_call.1} parent=83 // pred_check_branch
          %615 = sbr.rel (%p613) target = $region88
        $region87: #{tpu_custom_call.1} parent=83 // pred_region
          %616 = dma.done [#allocation4], 256
        $region88: #{tpu_custom_call.1} parent=83 // pred_fallthru
          _
        // Predicated region
        $region89: #{tpu_custom_call.1} parent=83 // pred_check
          %p617 = pneg %p89
        $region90: #{tpu_custom_call.1} parent=83 // pred_check_branch
          %619 = sbr.rel (%p617) target = $region92
        $region91: #{tpu_custom_call.1} parent=83 // pred_region
          %620 = dma.done [#allocation7], 32
        $region92: #{tpu_custom_call.1} parent=83 // pred_fallthru
          _
        %p621 = pneg %p63
        %p622 = pneg %p60
        %p623 = pneg %p89
        %p624 = pneg %p86
        %p625 = scmp.lt.s32.totalorder %s35, 1
        %s626 = scalar_select %p625, %s35, 1
        %s627 = scalar_lea.vmem %s2, %s626
        %p628 = pneg %p115
        %p629 = pneg %p112
        %p630 = scmp.lt.s32.totalorder %s35, 1
        %s631 = scalar_select %p630, %s35, 1
        %s632 = scalar_lea.vmem %s3, %s631
        %p633 = pneg %p141
        %p634 = pneg %p138
        %p635 = scmp.lt.s32.totalorder %s35, 1
        %s636 = scalar_select %p635, %s35, 1
        %s637 = smul.addr %s636, 4
        %s638 = smul.addr %s637, 4
        %s639 = scalar_lea.vmem %s4, %s638
        %p640 = pneg %p167
        %p641 = pneg %p164
        %p642 = scmp.lt.s32.totalorder %s35, 1
        %s643 = scalar_select %p642, %s35, 1
        %s644 = scalar_lea.vmem %s5, %s643
        %p645 = pneg %p193
        %p646 = pneg %p190
        %p647 = scmp.lt.s32.totalorder %s35, 1
        %s648 = scalar_select %p647, %s35, 1
        %s649 = smul.addr %s648, 4
        %s650 = smul.addr %s649, 4
        %s651 = scalar_lea.vmem %s6, %s650
        %p652 = pneg %p219
        %p653 = pneg %p216
        %p654 = scmp.lt.s32.totalorder %s35, 1
        %s655 = scalar_select %p654, %s35, 1
        %s656 = scalar_lea.vmem %s7, %s655
        %p657 = pneg %p245
        %p658 = pneg %p242
        %p659 = scmp.lt.s32.totalorder %s35, 1
        %s660 = scalar_select %p659, %s35, 1
        %s661 = scalar_lea.vmem %s8, %s660
        %p662 = pneg %p271
        %p663 = pneg %p268
        %p664 = scmp.lt.s32.totalorder %s35, 1
        %s665 = scalar_select %p664, %s35, 1
        %s666 = scalar_lea.vmem %s9, %s665
        %p667 = pneg %p297
        %p668 = pneg %p294
        %p669 = scmp.lt.s32.totalorder %s35, 1
        %s670 = scalar_select %p669, %s35, 1
        %s671 = smul.addr %s670, 4
        %s672 = smul.addr %s671, 4
        %s673 = scalar_lea.vmem %s10, %s672
        %p674 = pneg %p323
        %p675 = pneg %p320
        %p676 = scmp.lt.s32.totalorder %s35, 1
        %s677 = scalar_select %p676, %s35, 1
        %s678 = scalar_lea.vmem %s11, %s677
        %p679 = pneg %p349
        %p680 = pneg %p346
        %p681 = scmp.lt.s32.totalorder %s35, 1
        %s682 = scalar_select %p681, %s35, 1
        %s683 = smul.addr %s682, 8
        %s684 = smul.addr %s683, 4
        %s685 = scalar_lea.vmem %s12, %s684
        %p686 = pneg %p375
        %p687 = pneg %p372
        %p688 = scmp.lt.s32.totalorder %s35, 1
        %s689 = scalar_select %p688, %s35, 1
        %s690 = scalar_lea.vmem %s13, %s689
        %p691 = pneg %p401
        %p692 = pneg %p398
        %p693 = pneg %p422
        %p694 = pneg %p419
        %p695 = pneg %p443
        %p696 = pneg %p440
        %p697 = pneg %p469
        %p698 = pneg %p466
        %s699 = smul.u32 2, %s34
        %s700 = smul.u32 2, %s34
        %p701 = scmp.lt.s32.totalorder %s35, 1
        %s702 = scalar_select %p701, %s35, 1
        %s703 = scalar_lea.vmem %s2, %s702
        %p704 = scmp.lt.s32.totalorder %s35, 1
        %s705 = scalar_select %p704, %s35, 1
        %s706 = scalar_lea.vmem %s3, %s705
        %p707 = scmp.lt.s32.totalorder %s35, 1
        %s708 = scalar_select %p707, %s35, 1
        %s709 = smul.addr %s708, 4
        %s710 = smul.addr %s709, 4
        %s711 = scalar_lea.vmem %s4, %s710
        %p712 = scmp.lt.s32.totalorder %s35, 1
        %s713 = scalar_select %p712, %s35, 1
        %s714 = scalar_lea.vmem %s5, %s713
        %p715 = scmp.lt.s32.totalorder %s35, 1
        %s716 = scalar_select %p715, %s35, 1
        %s717 = smul.addr %s716, 4
        %s718 = smul.addr %s717, 4
        %s719 = scalar_lea.vmem %s6, %s718
        %p720 = scmp.lt.s32.totalorder %s35, 1
        %s721 = scalar_select %p720, %s35, 1
        %s722 = scalar_lea.vmem %s7, %s721
        %p723 = scmp.lt.s32.totalorder %s35, 1
        %s724 = scalar_select %p723, %s35, 1
        %s725 = scalar_lea.vmem %s8, %s724
        %p726 = scmp.lt.s32.totalorder %s35, 1
        %s727 = scalar_select %p726, %s35, 1
        %s728 = scalar_lea.vmem %s9, %s727
        %p729 = scmp.lt.s32.totalorder %s35, 1
        %s730 = scalar_select %p729, %s35, 1
        %s731 = smul.addr %s730, 4
        %s732 = smul.addr %s731, 4
        %s733 = scalar_lea.vmem %s10, %s732
        %p734 = scmp.lt.s32.totalorder %s35, 1
        %s735 = scalar_select %p734, %s35, 1
        %s736 = scalar_lea.vmem %s11, %s735
        %p737 = scmp.lt.s32.totalorder %s35, 1
        %s738 = scalar_select %p737, %s35, 1
        %s739 = smul.addr %s738, 8
        %s740 = smul.addr %s739, 4
        %s741 = scalar_lea.vmem %s12, %s740
        %p742 = scmp.lt.s32.totalorder %s35, 1
        %s743 = scalar_select %p742, %s35, 1
        %s744 = scalar_lea.vmem %s13, %s743
        %s745 = smul.u32 2, %s34
        %p747 = scmp.eq.s32.totalorder %s35, 0
        // Predicated region
        $region93: #{tpu_custom_call.1} parent=83 // pred_check
          %p748 = pneg %p747
        $region94: #{tpu_custom_call.1} parent=83 // pred_check_branch
          %750 = sbr.rel (%p748) target = $region96
        $region95: #{tpu_custom_call.1} parent=83 // pred_region
          %v751 = vld [vmem:[#allocation3] sm:$0xff]
          %v752 = vld [vmem:[#allocation3 + $0x8] sm:$0xff]
          %vm753 = vcmask 261120
          %754 = vst.msk [vmem:[#allocation2] sm:$0xff] %vm753, %v751
          %755 = vst.msk [vmem:[#allocation2 + $0x8] sm:$0xff] %vm753, %v752
        $region96: #{tpu_custom_call.1} parent=83 // pred_fallthru
          _
        %v756 = vld [vmem:[#allocation2] sm:$0xff]
        %v757 = vld [vmem:[#allocation2 + $0x8] sm:$0xff]
        %v758 = vld [vmem:[%s703] sm:$0x1]
        %v759 = vld [vmem:[%s706] sm:$0x1]
        %vm760 = vcmask 261120
        %v761 = vsel %vm760, %v756, 0.0
        %762 = vadd.xlane.f32.xlu0 %v761
        %v763 = vpop.xlane.xlu0 %762
        %v764 = vsel %vm760, %v757, 0.0
        %765 = vadd.xlane.f32.xlu0 %v764
        %v766 = vpop.xlane.xlu0 %765
        %v767 = vrcp.pop 32.0
        %v768 = vmul.f32 %v763, %v767
        %v769 = vmul.f32 %v766, %v767
        %v770 = vsub.f32 %v756, %v768
        %v771 = vsub.f32 %v757, %v769
        %v772 = vmul.f32 %v770, %v770
        %v773 = vmul.f32 %v771, %v771
        %v774 = vsel %vm760, %v772, 0.0
        %775 = vadd.xlane.f32.xlu0 %v774
        %v776 = vpop.xlane.xlu0 %775
        %v777 = vsel %vm760, %v773, 0.0
        %778 = vadd.xlane.f32.xlu0 %v777
        %v779 = vpop.xlane.xlu0 %778
        %v780 = vmul.f32 %v776, %v767
        %v781 = vmul.f32 %v779, %v767
        %v782 = vadd.f32 %v780, 1e-05
        %v783 = vadd.f32 %v781, 1e-05
        %v784 = vrsqrt.pop %v782
        %v785 = vrsqrt.pop %v783
        %v786 = vmul.f32 %v770, %v784
        %v787 = vmul.f32 %v771, %v785
        %v789 = vlaneseq
        %v790 = vshrl.u32 %v789, 7
        %v791 = vsub.s32 0, %v790
        %v792 = vrot.slane %v758, %v791
        %v794 = vmul.f32 %v786, %v792
        %v795 = vmul.f32 %v787, %v792
        %v797 = vlaneseq
        %v798 = vshrl.u32 %v797, 7
        %v799 = vsub.s32 0, %v798
        %v800 = vrot.slane %v759, %v799
        %v802 = vadd.f32 %v794, %v800
        %v803 = vadd.f32 %v795, %v800
        %v804 = vpack.c.bf16 %v803, %v802
        %v805 = vld [vmem:[%s711] sm:$0xf]
        %v806 = vld [vmem:[%s711 + $0x4] sm:$0xf]
        %v807 = vld [vmem:[%s711 + $0x8] sm:$0xf]
        %v808 = vld [vmem:[%s711 + $0xc] sm:$0xf]
        %v809 = vld [vmem:[%s714] sm:$0x1]
        %v811 = vlaneseq
        %v812 = vshrl.u32 %v811, 7
        %v813 = vsub.s32 0, %v812
        %v814 = vrot.slane %v809, %v813
        %v820 = vunpack.c.l.b16 %v805
        %v821 = vunpack.c.l.b16 %v806
        %v822 = vunpack.c.l.b16 %v807
        %v823 = vunpack.c.l.b16 %v808
        %v824 = vpack.c.b16 %v821, %v820
        %v825 = vpack.c.b16 %v823, %v822
        %v829 = vsel %vm760, %v804, 0
        %831 = vmatprep.subr.bf16.mxu0 0
        %832 = vmatpush1.bf16.msra.mxu0 0
        %833 = vmatprep.subr.bf16.mxu0 0
        %834 = vmatpush1.bf16.msra.mxu0 0
        %835 = vmatprep.subr.bf16.mxu0 0
        %836 = vmatpush1.bf16.msra.mxu0 0
        %837 = vmatprep.subr.bf16.mxu0 0
        %838 = vmatpush1.bf16.msra.mxu0 0
        %839 = vmatprep.subr.bf16.mxu0 0
        %840 = vmatpush1.bf16.msra.mxu0 0
        %841 = vmatprep.subr.bf16.mxu0 0
        %842 = vmatpush1.bf16.msra.mxu0 0
        %843 = vmatprep.subr.bf16.mxu0 0
        %844 = vmatpush1.bf16.msra.mxu0 %v825
        %845 = vmatprep.subr.bf16.mxu0 0
        %846 = vmatpush1.bf16.msra.mxu0 %v824
        %847 = vmatprep.subr.bf16.mxu0 0
        %848 = vmatpush2.bf16.msra.mxu0 0
        %849 = vmatprep.subr.bf16.mxu0 0
        %850 = vmatpush2.bf16.msra.mxu0 0
        %851 = vmatprep.subr.bf16.mxu0 0
        %852 = vmatpush2.bf16.msra.mxu0 0
        %853 = vmatprep.subr.bf16.mxu0 0
        %854 = vmatpush2.bf16.msra.mxu0 0
        %855 = vmatprep.subr.bf16.mxu0 0
        %856 = vmatpush2.bf16.msra.mxu0 0
        %857 = vmatprep.subr.bf16.mxu0 0
        %858 = vmatpush2.bf16.msra.mxu0 0
        %859 = vmatprep.subr.bf16.mxu0 0
        %860 = vmatpush2.bf16.msra.mxu0 0
        %861 = vmatprep.subr.bf16.mxu0 0
        %862 = vmatpush2.bf16.msra.mxu0 0
        %863 = vmatprep.mubr.bf16.mxu0 0
        %864 = vmatmul.mubr.bf16.gmra.mxu0 %v829
        %v865 = vpop.f32.mrf.mxu0
        %v866 = vadd.f32 %v814, %v865
        %v867 = vpop.f32.mrf.mxu0
        %v868 = vpop.f32.mrf.mxu0
        %v869 = vadd.f32 %v814, %v868
        %v870 = vpop.f32.mrf.mxu0
        %871 = vdwg.mxu0
        %v872 = vld [vmem:[#allocation6] sm:$0x1]
        %v873 = vld [vmem:[#allocation6 + $0x1] sm:$0x1]
        %v874 = vmul.f32 %v866, 0.35355338
        %v875 = vmul.f32 %v869, 0.35355338
        %v876 = vpack.c.bf16 %v874, %v874
        %v877 = vpack.c.bf16 %v875, %v875
        %v878 = vpack.c.bf16 %v866, %v866
        %v879 = vpack.c.bf16 %v869, %v869
        %v882 = vlaneseq
        %v883 = vshrl.u32 %v882, 7
        %v884 = vsub.s32 0, %v883
        %v885 = vrot.slane %v872, %v884
        %v886 = vlaneseq
        %v887 = vshrl.u32 %v886, 7
        %v888 = vsub.s32 0, %v887
        %v889 = vrot.slane %v873, %v888
        %893 = vrot.lane.b32.xlu0 %v878, 96
        %v894 = vpop.permute.xlu0 %893
        %vm895 = vcmask 64512
        %v897 = vsel %vm895, %v876, 0
        %v900 = vsel %vm895, %v894, 0
        %902 = vmatprep.subr.bf16.mxu0 0
        %903 = vmatpush1.bf16.xpose.msra.mxu0 0
        %904 = vmatprep.subr.bf16.mxu0 0
        %905 = vmatpush1.bf16.xpose.msra.mxu0 0
        %906 = vmatprep.subr.bf16.mxu0 0
        %907 = vmatpush1.bf16.xpose.msra.mxu0 0
        %908 = vmatprep.subr.bf16.mxu0 0
        %909 = vmatpush1.bf16.xpose.msra.mxu0 0
        %910 = vmatprep.subr.bf16.mxu0 0
        %911 = vmatpush1.bf16.xpose.msra.mxu0 0
        %912 = vmatprep.subr.bf16.mxu0 0
        %913 = vmatpush1.bf16.xpose.msra.mxu0 0
        %914 = vmatprep.subr.bf16.mxu0 0
        %915 = vmatpush1.bf16.xpose.msra.mxu0 0
        %916 = vmatprep.subr.bf16.mxu0 0
        %917 = vmatpush1.bf16.xpose.msra.mxu0 %v900
        %918 = vmatprep.subr.bf16.mxu0 0
        %919 = vmatpush2.bf16.xpose.msra.mxu0 0
        %920 = vmatprep.subr.bf16.mxu0 0
        %921 = vmatpush2.bf16.xpose.msra.mxu0 0
        %922 = vmatprep.subr.bf16.mxu0 0
        %923 = vmatpush2.bf16.xpose.msra.mxu0 0
        %924 = vmatprep.subr.bf16.mxu0 0
        %925 = vmatpush2.bf16.xpose.msra.mxu0 0
        %926 = vmatprep.subr.bf16.mxu0 0
        %927 = vmatpush2.bf16.xpose.msra.mxu0 0
        %928 = vmatprep.subr.bf16.mxu0 0
        %929 = vmatpush2.bf16.xpose.msra.mxu0 0
        %930 = vmatprep.subr.bf16.mxu0 0
        %931 = vmatpush2.bf16.xpose.msra.mxu0 0
        %932 = vmatprep.subr.bf16.mxu0 0
        %933 = vmatpush2.bf16.xpose.msra.mxu0 0
        %934 = vmatprep.mubr.bf16.mxu0 0
        %935 = vmatmul.mubr.bf16.gmra.mxu0 %v897
        %v936 = vpop.f32.mrf.mxu0
        %v937 = vadd.f32 %v885, %v936
        %v938 = vpop.f32.mrf.mxu0
        %v939 = vpop.f32.mrf.mxu0
        %v940 = vpop.f32.mrf.mxu0
        %941 = vdwg.mxu0
        %943 = vrot.lane.b32.xlu0 %v879, 96
        %v944 = vpop.permute.xlu0 %943
        %v946 = vsel %vm895, %v877, 0
        %v949 = vsel %vm895, %v944, 0
        %951 = vmatprep.subr.bf16.mxu0 0
        %952 = vmatpush1.bf16.xpose.msra.mxu0 0
        %953 = vmatprep.subr.bf16.mxu0 0
        %954 = vmatpush1.bf16.xpose.msra.mxu0 0
        %955 = vmatprep.subr.bf16.mxu0 0
        %956 = vmatpush1.bf16.xpose.msra.mxu0 0
        %957 = vmatprep.subr.bf16.mxu0 0
        %958 = vmatpush1.bf16.xpose.msra.mxu0 0
        %959 = vmatprep.subr.bf16.mxu0 0
        %960 = vmatpush1.bf16.xpose.msra.mxu0 0
        %961 = vmatprep.subr.bf16.mxu0 0
        %962 = vmatpush1.bf16.xpose.msra.mxu0 0
        %963 = vmatprep.subr.bf16.mxu0 0
        %964 = vmatpush1.bf16.xpose.msra.mxu0 0
        %965 = vmatprep.subr.bf16.mxu0 0
        %966 = vmatpush1.bf16.xpose.msra.mxu0 %v949
        %967 = vmatprep.subr.bf16.mxu0 0
        %968 = vmatpush2.bf16.xpose.msra.mxu0 0
        %969 = vmatprep.subr.bf16.mxu0 0
        %970 = vmatpush2.bf16.xpose.msra.mxu0 0
        %971 = vmatprep.subr.bf16.mxu0 0
        %972 = vmatpush2.bf16.xpose.msra.mxu0 0
        %973 = vmatprep.subr.bf16.mxu0 0
        %974 = vmatpush2.bf16.xpose.msra.mxu0 0
        %975 = vmatprep.subr.bf16.mxu0 0
        %976 = vmatpush2.bf16.xpose.msra.mxu0 0
        %977 = vmatprep.subr.bf16.mxu0 0
        %978 = vmatpush2.bf16.xpose.msra.mxu0 0
        %979 = vmatprep.subr.bf16.mxu0 0
        %980 = vmatpush2.bf16.xpose.msra.mxu0 0
        %981 = vmatprep.subr.bf16.mxu0 0
        %982 = vmatpush2.bf16.xpose.msra.mxu0 0
        %983 = vmatprep.mubr.bf16.mxu0 0
        %984 = vmatmul.mubr.bf16.gmra.mxu0 %v946
        %v985 = vpop.f32.mrf.mxu0
        %v986 = vadd.f32 %v889, %v985
        %v987 = vpop.f32.mrf.mxu0
        %v988 = vpop.f32.mrf.mxu0
        %v989 = vpop.f32.mrf.mxu0
        %990 = vdwg.mxu0
        %v991 = vsel %vm895, %v937, -inf
        %992 = vmax.xlane.f32.xlu0 %v991
        %v993 = vpop.xlane.xlu0 %992
        %v994 = vsel %vm895, %v986, -inf
        %995 = vmax.xlane.f32.xlu0 %v994
        %v996 = vpop.xlane.xlu0 %995
        %v997 = vsub.f32 %v937, %v993
        %v998 = vsub.f32 %v986, %v996
        %v999 = vmul.f32 %v997, 1.442695
        %v1000 = vpow.pop %v999
        %v1001 = vmul.f32 %v998, 1.442695
        %v1002 = vpow.pop %v1001
        %v1003 = vsel %vm895, %v1000, 0.0
        %1004 = vadd.xlane.f32.xlu0 %v1003
        %v1005 = vpop.xlane.xlu0 %1004
        %v1006 = vsel %vm895, %v1002, 0.0
        %1007 = vadd.xlane.f32.xlu0 %v1006
        %v1008 = vpop.xlane.xlu0 %1007
        %v1009 = vrcp.pop %v1005
        %v1010 = vrcp.pop %v1008
        %v1011 = vmul.f32 %v1000, %v1009
        %v1012 = vmul.f32 %v1002, %v1010
        %v1013 = vpack.c.bf16 %v1011, %v1011
        %v1014 = vpack.c.bf16 %v1012, %v1012
        %1015 = vrot.lane.b32.xlu0 %v878, 64
        %v1016 = vpop.permute.xlu0 %1015
        %v1018 = vsel %vm895, %v1013, 0
        %vm1020 = vcmask 1043456
        %v1022 = vsel %vm1020, %v1016, 0
        %1024 = vmatprep.subr.bf16.mxu0 0
        %1025 = vmatpush1.bf16.msra.mxu0 0
        %1026 = vmatprep.subr.bf16.mxu0 0
        %1027 = vmatpush1.bf16.msra.mxu0 0
        %1028 = vmatprep.subr.bf16.mxu0 0
        %1029 = vmatpush1.bf16.msra.mxu0 0
        %1030 = vmatprep.subr.bf16.mxu0 0
        %1031 = vmatpush1.bf16.msra.mxu0 0
        %1032 = vmatprep.subr.bf16.mxu0 0
        %1033 = vmatpush1.bf16.msra.mxu0 0
        %1034 = vmatprep.subr.bf16.mxu0 0
        %1035 = vmatpush1.bf16.msra.mxu0 0
        %1036 = vmatprep.subr.bf16.mxu0 0
        %1037 = vmatpush1.bf16.msra.mxu0 0
        %1038 = vmatprep.subr.bf16.mxu0 0
        %1039 = vmatpush1.bf16.msra.mxu0 %v1022
        %1040 = vmatprep.subr.bf16.mxu0 0
        %1041 = vmatpush2.bf16.msra.mxu0 0
        %1042 = vmatprep.subr.bf16.mxu0 0
        %1043 = vmatpush2.bf16.msra.mxu0 0
        %1044 = vmatprep.subr.bf16.mxu0 0
        %1045 = vmatpush2.bf16.msra.mxu0 0
        %1046 = vmatprep.subr.bf16.mxu0 0
        %1047 = vmatpush2.bf16.msra.mxu0 0
        %1048 = vmatprep.subr.bf16.mxu0 0
        %1049 = vmatpush2.bf16.msra.mxu0 0
        %1050 = vmatprep.subr.bf16.mxu0 0
        %1051 = vmatpush2.bf16.msra.mxu0 0
        %1052 = vmatprep.subr.bf16.mxu0 0
        %1053 = vmatpush2.bf16.msra.mxu0 0
        %1054 = vmatprep.subr.bf16.mxu0 0
        %1055 = vmatpush2.bf16.msra.mxu0 0
        %1056 = vmatprep.mubr.bf16.mxu0 0
        %1057 = vmatmul.mubr.bf16.gmra.mxu0 %v1018
        %v1058 = vpop.f32.mrf.mxu0
        %v1059 = vadd.f32 0.0, %v1058
        %v1060 = vpop.f32.mrf.mxu0
        %v1061 = vpop.f32.mrf.mxu0
        %v1062 = vpop.f32.mrf.mxu0
        %1063 = vdwg.mxu0
        %1064 = vrot.lane.b32.xlu0 %v879, 64
        %v1065 = vpop.permute.xlu0 %1064
        %v1067 = vsel %vm895, %v1014, 0
        %v1070 = vsel %vm1020, %v1065, 0
        %1072 = vmatprep.subr.bf16.mxu0 0
        %1073 = vmatpush1.bf16.msra.mxu0 0
        %1074 = vmatprep.subr.bf16.mxu0 0
        %1075 = vmatpush1.bf16.msra.mxu0 0
        %1076 = vmatprep.subr.bf16.mxu0 0
        %1077 = vmatpush1.bf16.msra.mxu0 0
        %1078 = vmatprep.subr.bf16.mxu0 0
        %1079 = vmatpush1.bf16.msra.mxu0 0
        %1080 = vmatprep.subr.bf16.mxu0 0
        %1081 = vmatpush1.bf16.msra.mxu0 0
        %1082 = vmatprep.subr.bf16.mxu0 0
        %1083 = vmatpush1.bf16.msra.mxu0 0
        %1084 = vmatprep.subr.bf16.mxu0 0
        %1085 = vmatpush1.bf16.msra.mxu0 0
        %1086 = vmatprep.subr.bf16.mxu0 0
        %1087 = vmatpush1.bf16.msra.mxu0 %v1070
        %1088 = vmatprep.subr.bf16.mxu0 0
        %1089 = vmatpush2.bf16.msra.mxu0 0
        %1090 = vmatprep.subr.bf16.mxu0 0
        %1091 = vmatpush2.bf16.msra.mxu0 0
        %1092 = vmatprep.subr.bf16.mxu0 0
        %1093 = vmatpush2.bf16.msra.mxu0 0
        %1094 = vmatprep.subr.bf16.mxu0 0
        %1095 = vmatpush2.bf16.msra.mxu0 0
        %1096 = vmatprep.subr.bf16.mxu0 0
        %1097 = vmatpush2.bf16.msra.mxu0 0
        %1098 = vmatprep.subr.bf16.mxu0 0
        %1099 = vmatpush2.bf16.msra.mxu0 0
        %1100 = vmatprep.subr.bf16.mxu0 0
        %1101 = vmatpush2.bf16.msra.mxu0 0
        %1102 = vmatprep.subr.bf16.mxu0 0
        %1103 = vmatpush2.bf16.msra.mxu0 0
        %1104 = vmatprep.mubr.bf16.mxu0 0
        %1105 = vmatmul.mubr.bf16.gmra.mxu0 %v1067
        %v1106 = vpop.f32.mrf.mxu0
        %v1107 = vadd.f32 0.0, %v1106
        %v1108 = vpop.f32.mrf.mxu0
        %v1109 = vpop.f32.mrf.mxu0
        %v1110 = vpop.f32.mrf.mxu0
        %1111 = vdwg.mxu0
        %1113 = vrot.lane.b32.xlu0 %v876, 120
        %v1114 = vpop.permute.xlu0 %1113
        %1115 = vrot.lane.b32.xlu0 %v878, 88
        %v1116 = vpop.permute.xlu0 %1115
        %v1118 = vsel %vm895, %v1114, 0
        %v1121 = vsel %vm895, %v1116, 0
        %1123 = vmatprep.subr.bf16.mxu0 0
        %1124 = vmatpush1.bf16.xpose.msra.mxu0 0
        %1125 = vmatprep.subr.bf16.mxu0 0
        %1126 = vmatpush1.bf16.xpose.msra.mxu0 0
        %1127 = vmatprep.subr.bf16.mxu0 0
        %1128 = vmatpush1.bf16.xpose.msra.mxu0 0
        %1129 = vmatprep.subr.bf16.mxu0 0
        %1130 = vmatpush1.bf16.xpose.msra.mxu0 0
        %1131 = vmatprep.subr.bf16.mxu0 0
        %1132 = vmatpush1.bf16.xpose.msra.mxu0 0
        %1133 = vmatprep.subr.bf16.mxu0 0
        %1134 = vmatpush1.bf16.xpose.msra.mxu0 0
        %1135 = vmatprep.subr.bf16.mxu0 0
        %1136 = vmatpush1.bf16.xpose.msra.mxu0 0
        %1137 = vmatprep.subr.bf16.mxu0 0
        %1138 = vmatpush1.bf16.xpose.msra.mxu0 %v1121
        %1139 = vmatprep.subr.bf16.mxu0 0
        %1140 = vmatpush2.bf16.xpose.msra.mxu0 0
        %1141 = vmatprep.subr.bf16.mxu0 0
        %1142 = vmatpush2.bf16.xpose.msra.mxu0 0
        %1143 = vmatprep.subr.bf16.mxu0 0
        %1144 = vmatpush2.bf16.xpose.msra.mxu0 0
        %1145 = vmatprep.subr.bf16.mxu0 0
        %1146 = vmatpush2.bf16.xpose.msra.mxu0 0
        %1147 = vmatprep.subr.bf16.mxu0 0
        %1148 = vmatpush2.bf16.xpose.msra.mxu0 0
        %1149 = vmatprep.subr.bf16.mxu0 0
        %1150 = vmatpush2.bf16.xpose.msra.mxu0 0
        %1151 = vmatprep.subr.bf16.mxu0 0
        %1152 = vmatpush2.bf16.xpose.msra.mxu0 0
        %1153 = vmatprep.subr.bf16.mxu0 0
        %1154 = vmatpush2.bf16.xpose.msra.mxu0 0
        %1155 = vmatprep.mubr.bf16.mxu0 0
        %1156 = vmatmul.mubr.bf16.gmra.mxu0 %v1118
        %v1157 = vpop.f32.mrf.mxu0
        %v1158 = vadd.f32 %v885, %v1157
        %v1159 = vpop.f32.mrf.mxu0
        %v1160 = vpop.f32.mrf.mxu0
        %v1161 = vpop.f32.mrf.mxu0
        %1162 = vdwg.mxu0
        %1164 = vrot.lane.b32.xlu0 %v877, 120
        %v1165 = vpop.permute.xlu0 %1164
        %1166 = vrot.lane.b32.xlu0 %v879, 88
        %v1167 = vpop.permute.xlu0 %1166
        %v1169 = vsel %vm895, %v1165, 0
        %v1172 = vsel %vm895, %v1167, 0
        %1174 = vmatprep.subr.bf16.mxu0 0
        %1175 = vmatpush1.bf16.xpose.msra.mxu0 0
        %1176 = vmatprep.subr.bf16.mxu0 0
        %1177 = vmatpush1.bf16.xpose.msra.mxu0 0
        %1178 = vmatprep.subr.bf16.mxu0 0
        %1179 = vmatpush1.bf16.xpose.msra.mxu0 0
        %1180 = vmatprep.subr.bf16.mxu0 0
        %1181 = vmatpush1.bf16.xpose.msra.mxu0 0
        %1182 = vmatprep.subr.bf16.mxu0 0
        %1183 = vmatpush1.bf16.xpose.msra.mxu0 0
        %1184 = vmatprep.subr.bf16.mxu0 0
        %1185 = vmatpush1.bf16.xpose.msra.mxu0 0
        %1186 = vmatprep.subr.bf16.mxu0 0
        %1187 = vmatpush1.bf16.xpose.msra.mxu0 0
        %1188 = vmatprep.subr.bf16.mxu0 0
        %1189 = vmatpush1.bf16.xpose.msra.mxu0 %v1172
        %1190 = vmatprep.subr.bf16.mxu0 0
        %1191 = vmatpush2.bf16.xpose.msra.mxu0 0
        %1192 = vmatprep.subr.bf16.mxu0 0
        %1193 = vmatpush2.bf16.xpose.msra.mxu0 0
        %1194 = vmatprep.subr.bf16.mxu0 0
        %1195 = vmatpush2.bf16.xpose.msra.mxu0 0
        %1196 = vmatprep.subr.bf16.mxu0 0
        %1197 = vmatpush2.bf16.xpose.msra.mxu0 0
        %1198 = vmatprep.subr.bf16.mxu0 0
        %1199 = vmatpush2.bf16.xpose.msra.mxu0 0
        %1200 = vmatprep.subr.bf16.mxu0 0
        %1201 = vmatpush2.bf16.xpose.msra.mxu0 0
        %1202 = vmatprep.subr.bf16.mxu0 0
        %1203 = vmatpush2.bf16.xpose.msra.mxu0 0
        %1204 = vmatprep.subr.bf16.mxu0 0
        %1205 = vmatpush2.bf16.xpose.msra.mxu0 0
        %1206 = vmatprep.mubr.bf16.mxu0 0
        %1207 = vmatmul.mubr.bf16.gmra.mxu0 %v1169
        %v1208 = vpop.f32.mrf.mxu0
        %v1209 = vadd.f32 %v889, %v1208
        %v1210 = vpop.f32.mrf.mxu0
        %v1211 = vpop.f32.mrf.mxu0
        %v1212 = vpop.f32.mrf.mxu0
        %1213 = vdwg.mxu0
        %v1214 = vsel %vm895, %v1158, -inf
        %1215 = vmax.xlane.f32.xlu0 %v1214
        %v1216 = vpop.xlane.xlu0 %1215
        %v1217 = vsel %vm895, %v1209, -inf
        %1218 = vmax.xlane.f32.xlu0 %v1217
        %v1219 = vpop.xlane.xlu0 %1218
        %v1220 = vsub.f32 %v1158, %v1216
        %v1221 = vsub.f32 %v1209, %v1219
        %v1222 = vmul.f32 %v1220, 1.442695
        %v1223 = vpow.pop %v1222
        %v1224 = vmul.f32 %v1221, 1.442695
        %v1225 = vpow.pop %v1224
        %v1226 = vsel %vm895, %v1223, 0.0
        %1227 = vadd.xlane.f32.xlu0 %v1226
        %v1228 = vpop.xlane.xlu0 %1227
        %v1229 = vsel %vm895, %v1225, 0.0
        %1230 = vadd.xlane.f32.xlu0 %v1229
        %v1231 = vpop.xlane.xlu0 %1230
        %v1232 = vrcp.pop %v1228
        %v1233 = vrcp.pop %v1231
        %v1234 = vmul.f32 %v1223, %v1232
        %v1235 = vmul.f32 %v1225, %v1233
        %v1236 = vpack.c.bf16 %v1234, %v1234
        %v1237 = vpack.c.bf16 %v1235, %v1235
        %1238 = vrot.lane.b32.xlu0 %v878, 56
        %v1239 = vpop.permute.xlu0 %1238
        %v1241 = vsel %vm895, %v1236, 0
        %v1244 = vsel %vm1020, %v1239, 0
        %1246 = vmatprep.subr.bf16.mxu0 0
        %1247 = vmatpush1.bf16.msra.mxu0 0
        %1248 = vmatprep.subr.bf16.mxu0 0
        %1249 = vmatpush1.bf16.msra.mxu0 0
        %1250 = vmatprep.subr.bf16.mxu0 0
        %1251 = vmatpush1.bf16.msra.mxu0 0
        %1252 = vmatprep.subr.bf16.mxu0 0
        %1253 = vmatpush1.bf16.msra.mxu0 0
        %1254 = vmatprep.subr.bf16.mxu0 0
        %1255 = vmatpush1.bf16.msra.mxu0 0
        %1256 = vmatprep.subr.bf16.mxu0 0
        %1257 = vmatpush1.bf16.msra.mxu0 0
        %1258 = vmatprep.subr.bf16.mxu0 0
        %1259 = vmatpush1.bf16.msra.mxu0 0
        %1260 = vmatprep.subr.bf16.mxu0 0
        %1261 = vmatpush1.bf16.msra.mxu0 %v1244
        %1262 = vmatprep.subr.bf16.mxu0 0
        %1263 = vmatpush2.bf16.msra.mxu0 0
        %1264 = vmatprep.subr.bf16.mxu0 0
        %1265 = vmatpush2.bf16.msra.mxu0 0
        %1266 = vmatprep.subr.bf16.mxu0 0
        %1267 = vmatpush2.bf16.msra.mxu0 0
        %1268 = vmatprep.subr.bf16.mxu0 0
        %1269 = vmatpush2.bf16.msra.mxu0 0
        %1270 = vmatprep.subr.bf16.mxu0 0
        %1271 = vmatpush2.bf16.msra.mxu0 0
        %1272 = vmatprep.subr.bf16.mxu0 0
        %1273 = vmatpush2.bf16.msra.mxu0 0
        %1274 = vmatprep.subr.bf16.mxu0 0
        %1275 = vmatpush2.bf16.msra.mxu0 0
        %1276 = vmatprep.subr.bf16.mxu0 0
        %1277 = vmatpush2.bf16.msra.mxu0 0
        %1278 = vmatprep.mubr.bf16.mxu0 0
        %1279 = vmatmul.mubr.bf16.gmra.mxu0 %v1241
        %v1280 = vpop.f32.mrf.mxu0
        %v1281 = vadd.f32 0.0, %v1280
        %v1282 = vpop.f32.mrf.mxu0
        %v1283 = vpop.f32.mrf.mxu0
        %v1284 = vpop.f32.mrf.mxu0
        %1285 = vdwg.mxu0
        %1286 = vrot.lane.b32.xlu0 %v879, 56
        %v1287 = vpop.permute.xlu0 %1286
        %v1289 = vsel %vm895, %v1237, 0
        %v1292 = vsel %vm1020, %v1287, 0
        %1294 = vmatprep.subr.bf16.mxu0 0
        %1295 = vmatpush1.bf16.msra.mxu0 0
        %1296 = vmatprep.subr.bf16.mxu0 0
        %1297 = vmatpush1.bf16.msra.mxu0 0
        %1298 = vmatprep.subr.bf16.mxu0 0
        %1299 = vmatpush1.bf16.msra.mxu0 0
        %1300 = vmatprep.subr.bf16.mxu0 0
        %1301 = vmatpush1.bf16.msra.mxu0 0
        %1302 = vmatprep.subr.bf16.mxu0 0
        %1303 = vmatpush1.bf16.msra.mxu0 0
        %1304 = vmatprep.subr.bf16.mxu0 0
        %1305 = vmatpush1.bf16.msra.mxu0 0
        %1306 = vmatprep.subr.bf16.mxu0 0
        %1307 = vmatpush1.bf16.msra.mxu0 0
        %1308 = vmatprep.subr.bf16.mxu0 0
        %1309 = vmatpush1.bf16.msra.mxu0 %v1292
        %1310 = vmatprep.subr.bf16.mxu0 0
        %1311 = vmatpush2.bf16.msra.mxu0 0
        %1312 = vmatprep.subr.bf16.mxu0 0
        %1313 = vmatpush2.bf16.msra.mxu0 0
        %1314 = vmatprep.subr.bf16.mxu0 0
        %1315 = vmatpush2.bf16.msra.mxu0 0
        %1316 = vmatprep.subr.bf16.mxu0 0
        %1317 = vmatpush2.bf16.msra.mxu0 0
        %1318 = vmatprep.subr.bf16.mxu0 0
        %1319 = vmatpush2.bf16.msra.mxu0 0
        %1320 = vmatprep.subr.bf16.mxu0 0
        %1321 = vmatpush2.bf16.msra.mxu0 0
        %1322 = vmatprep.subr.bf16.mxu0 0
        %1323 = vmatpush2.bf16.msra.mxu0 0
        %1324 = vmatprep.subr.bf16.mxu0 0
        %1325 = vmatpush2.bf16.msra.mxu0 0
        %1326 = vmatprep.mubr.bf16.mxu0 0
        %1327 = vmatmul.mubr.bf16.gmra.mxu0 %v1289
        %v1328 = vpop.f32.mrf.mxu0
        %v1329 = vadd.f32 0.0, %v1328
        %v1330 = vpop.f32.mrf.mxu0
        %v1331 = vpop.f32.mrf.mxu0
        %v1332 = vpop.f32.mrf.mxu0
        %1333 = vdwg.mxu0
        %1334 = vrot.lane.b32.xlu0 %v876, 112
        %v1335 = vpop.permute.xlu0 %1334
        %1336 = vrot.lane.b32.xlu0 %v878, 80
        %v1337 = vpop.permute.xlu0 %1336
        %v1339 = vsel %vm895, %v1335, 0
        %v1342 = vsel %vm895, %v1337, 0
        %1344 = vmatprep.subr.bf16.mxu0 0
        %1345 = vmatpush1.bf16.xpose.msra.mxu0 0
        %1346 = vmatprep.subr.bf16.mxu0 0
        %1347 = vmatpush1.bf16.xpose.msra.mxu0 0
        %1348 = vmatprep.subr.bf16.mxu0 0
        %1349 = vmatpush1.bf16.xpose.msra.mxu0 0
        %1350 = vmatprep.subr.bf16.mxu0 0
        %1351 = vmatpush1.bf16.xpose.msra.mxu0 0
        %1352 = vmatprep.subr.bf16.mxu0 0
        %1353 = vmatpush1.bf16.xpose.msra.mxu0 0
        %1354 = vmatprep.subr.bf16.mxu0 0
        %1355 = vmatpush1.bf16.xpose.msra.mxu0 0
        %1356 = vmatprep.subr.bf16.mxu0 0
        %1357 = vmatpush1.bf16.xpose.msra.mxu0 0
        %1358 = vmatprep.subr.bf16.mxu0 0
        %1359 = vmatpush1.bf16.xpose.msra.mxu0 %v1342
        %1360 = vmatprep.subr.bf16.mxu0 0
        %1361 = vmatpush2.bf16.xpose.msra.mxu0 0
        %1362 = vmatprep.subr.bf16.mxu0 0
        %1363 = vmatpush2.bf16.xpose.msra.mxu0 0
        %1364 = vmatprep.subr.bf16.mxu0 0
        %1365 = vmatpush2.bf16.xpose.msra.mxu0 0
        %1366 = vmatprep.subr.bf16.mxu0 0
        %1367 = vmatpush2.bf16.xpose.msra.mxu0 0
        %1368 = vmatprep.subr.bf16.mxu0 0
        %1369 = vmatpush2.bf16.xpose.msra.mxu0 0
        %1370 = vmatprep.subr.bf16.mxu0 0
        %1371 = vmatpush2.bf16.xpose.msra.mxu0 0
        %1372 = vmatprep.subr.bf16.mxu0 0
        %1373 = vmatpush2.bf16.xpose.msra.mxu0 0
        %1374 = vmatprep.subr.bf16.mxu0 0
        %1375 = vmatpush2.bf16.xpose.msra.mxu0 0
        %1376 = vmatprep.mubr.bf16.mxu0 0
        %1377 = vmatmul.mubr.bf16.gmra.mxu0 %v1339
        %v1378 = vpop.f32.mrf.mxu0
        %v1379 = vadd.f32 %v885, %v1378
        %v1380 = vpop.f32.mrf.mxu0
        %v1381 = vpop.f32.mrf.mxu0
        %v1382 = vpop.f32.mrf.mxu0
        %1383 = vdwg.mxu0
        %1384 = vrot.lane.b32.xlu0 %v877, 112
        %v1385 = vpop.permute.xlu0 %1384
        %1386 = vrot.lane.b32.xlu0 %v879, 80
        %v1387 = vpop.permute.xlu0 %1386
        %v1389 = vsel %vm895, %v1385, 0
        %v1392 = vsel %vm895, %v1387, 0
        %1394 = vmatprep.subr.bf16.mxu0 0
        %1395 = vmatpush1.bf16.xpose.msra.mxu0 0
        %1396 = vmatprep.subr.bf16.mxu0 0
        %1397 = vmatpush1.bf16.xpose.msra.mxu0 0
        %1398 = vmatprep.subr.bf16.mxu0 0
        %1399 = vmatpush1.bf16.xpose.msra.mxu0 0
        %1400 = vmatprep.subr.bf16.mxu0 0
        %1401 = vmatpush1.bf16.xpose.msra.mxu0 0
        %1402 = vmatprep.subr.bf16.mxu0 0
        %1403 = vmatpush1.bf16.xpose.msra.mxu0 0
        %1404 = vmatprep.subr.bf16.mxu0 0
        %1405 = vmatpush1.bf16.xpose.msra.mxu0 0
        %1406 = vmatprep.subr.bf16.mxu0 0
        %1407 = vmatpush1.bf16.xpose.msra.mxu0 0
        %1408 = vmatprep.subr.bf16.mxu0 0
        %1409 = vmatpush1.bf16.xpose.msra.mxu0 %v1392
        %1410 = vmatprep.subr.bf16.mxu0 0
        %1411 = vmatpush2.bf16.xpose.msra.mxu0 0
        %1412 = vmatprep.subr.bf16.mxu0 0
        %1413 = vmatpush2.bf16.xpose.msra.mxu0 0
        %1414 = vmatprep.subr.bf16.mxu0 0
        %1415 = vmatpush2.bf16.xpose.msra.mxu0 0
        %1416 = vmatprep.subr.bf16.mxu0 0
        %1417 = vmatpush2.bf16.xpose.msra.mxu0 0
        %1418 = vmatprep.subr.bf16.mxu0 0
        %1419 = vmatpush2.bf16.xpose.msra.mxu0 0
        %1420 = vmatprep.subr.bf16.mxu0 0
        %1421 = vmatpush2.bf16.xpose.msra.mxu0 0
        %1422 = vmatprep.subr.bf16.mxu0 0
        %1423 = vmatpush2.bf16.xpose.msra.mxu0 0
        %1424 = vmatprep.subr.bf16.mxu0 0
        %1425 = vmatpush2.bf16.xpose.msra.mxu0 0
        %1426 = vmatprep.mubr.bf16.mxu0 0
        %1427 = vmatmul.mubr.bf16.gmra.mxu0 %v1389
        %v1428 = vpop.f32.mrf.mxu0
        %v1429 = vadd.f32 %v889, %v1428
        %v1430 = vpop.f32.mrf.mxu0
        %v1431 = vpop.f32.mrf.mxu0
        %v1432 = vpop.f32.mrf.mxu0
        %1433 = vdwg.mxu0
        %v1434 = vsel %vm895, %v1379, -inf
        %1435 = vmax.xlane.f32.xlu0 %v1434
        %v1436 = vpop.xlane.xlu0 %1435
        %v1437 = vsel %vm895, %v1429, -inf
        %1438 = vmax.xlane.f32.xlu0 %v1437
        %v1439 = vpop.xlane.xlu0 %1438
        %v1440 = vsub.f32 %v1379, %v1436
        %v1441 = vsub.f32 %v1429, %v1439
        %v1442 = vmul.f32 %v1440, 1.442695
        %v1443 = vpow.pop %v1442
        %v1444 = vmul.f32 %v1441, 1.442695
        %v1445 = vpow.pop %v1444
        %v1446 = vsel %vm895, %v1443, 0.0
        %1447 = vadd.xlane.f32.xlu0 %v1446
        %v1448 = vpop.xlane.xlu0 %1447
        %v1449 = vsel %vm895, %v1445, 0.0
        %1450 = vadd.xlane.f32.xlu0 %v1449
        %v1451 = vpop.xlane.xlu0 %1450
        %v1452 = vrcp.pop %v1448
        %v1453 = vrcp.pop %v1451
        %v1454 = vmul.f32 %v1443, %v1452
        %v1455 = vmul.f32 %v1445, %v1453
        %v1456 = vpack.c.bf16 %v1454, %v1454
        %v1457 = vpack.c.bf16 %v1455, %v1455
        %1458 = vrot.lane.b32.xlu0 %v878, 48
        %v1459 = vpop.permute.xlu0 %1458
        %v1461 = vsel %vm895, %v1456, 0
        %v1464 = vsel %vm1020, %v1459, 0
        %1466 = vmatprep.subr.bf16.mxu0 0
        %1467 = vmatpush1.bf16.msra.mxu0 0
        %1468 = vmatprep.subr.bf16.mxu0 0
        %1469 = vmatpush1.bf16.msra.mxu0 0
        %1470 = vmatprep.subr.bf16.mxu0 0
        %1471 = vmatpush1.bf16.msra.mxu0 0
        %1472 = vmatprep.subr.bf16.mxu0 0
        %1473 = vmatpush1.bf16.msra.mxu0 0
        %1474 = vmatprep.subr.bf16.mxu0 0
        %1475 = vmatpush1.bf16.msra.mxu0 0
        %1476 = vmatprep.subr.bf16.mxu0 0
        %1477 = vmatpush1.bf16.msra.mxu0 0
        %1478 = vmatprep.subr.bf16.mxu0 0
        %1479 = vmatpush1.bf16.msra.mxu0 0
        %1480 = vmatprep.subr.bf16.mxu0 0
        %1481 = vmatpush1.bf16.msra.mxu0 %v1464
        %1482 = vmatprep.subr.bf16.mxu0 0
        %1483 = vmatpush2.bf16.msra.mxu0 0
        %1484 = vmatprep.subr.bf16.mxu0 0
        %1485 = vmatpush2.bf16.msra.mxu0 0
        %1486 = vmatprep.subr.bf16.mxu0 0
        %1487 = vmatpush2.bf16.msra.mxu0 0
        %1488 = vmatprep.subr.bf16.mxu0 0
        %1489 = vmatpush2.bf16.msra.mxu0 0
        %1490 = vmatprep.subr.bf16.mxu0 0
        %1491 = vmatpush2.bf16.msra.mxu0 0
        %1492 = vmatprep.subr.bf16.mxu0 0
        %1493 = vmatpush2.bf16.msra.mxu0 0
        %1494 = vmatprep.subr.bf16.mxu0 0
        %1495 = vmatpush2.bf16.msra.mxu0 0
        %1496 = vmatprep.subr.bf16.mxu0 0
        %1497 = vmatpush2.bf16.msra.mxu0 0
        %1498 = vmatprep.mubr.bf16.mxu0 0
        %1499 = vmatmul.mubr.bf16.gmra.mxu0 %v1461
        %v1500 = vpop.f32.mrf.mxu0
        %v1501 = vadd.f32 0.0, %v1500
        %v1502 = vpop.f32.mrf.mxu0
        %v1503 = vpop.f32.mrf.mxu0
        %v1504 = vpop.f32.mrf.mxu0
        %1505 = vdwg.mxu0
        %1506 = vrot.lane.b32.xlu0 %v879, 48
        %v1507 = vpop.permute.xlu0 %1506
        %v1509 = vsel %vm895, %v1457, 0
        %v1512 = vsel %vm1020, %v1507, 0
        %1514 = vmatprep.subr.bf16.mxu0 0
        %1515 = vmatpush1.bf16.msra.mxu0 0
        %1516 = vmatprep.subr.bf16.mxu0 0
        %1517 = vmatpush1.bf16.msra.mxu0 0
        %1518 = vmatprep.subr.bf16.mxu0 0
        %1519 = vmatpush1.bf16.msra.mxu0 0
        %1520 = vmatprep.subr.bf16.mxu0 0
        %1521 = vmatpush1.bf16.msra.mxu0 0
        %1522 = vmatprep.subr.bf16.mxu0 0
        %1523 = vmatpush1.bf16.msra.mxu0 0
        %1524 = vmatprep.subr.bf16.mxu0 0
        %1525 = vmatpush1.bf16.msra.mxu0 0
        %1526 = vmatprep.subr.bf16.mxu0 0
        %1527 = vmatpush1.bf16.msra.mxu0 0
        %1528 = vmatprep.subr.bf16.mxu0 0
        %1529 = vmatpush1.bf16.msra.mxu0 %v1512
        %1530 = vmatprep.subr.bf16.mxu0 0
        %1531 = vmatpush2.bf16.msra.mxu0 0
        %1532 = vmatprep.subr.bf16.mxu0 0
        %1533 = vmatpush2.bf16.msra.mxu0 0
        %1534 = vmatprep.subr.bf16.mxu0 0
        %1535 = vmatpush2.bf16.msra.mxu0 0
        %1536 = vmatprep.subr.bf16.mxu0 0
        %1537 = vmatpush2.bf16.msra.mxu0 0
        %1538 = vmatprep.subr.bf16.mxu0 0
        %1539 = vmatpush2.bf16.msra.mxu0 0
        %1540 = vmatprep.subr.bf16.mxu0 0
        %1541 = vmatpush2.bf16.msra.mxu0 0
        %1542 = vmatprep.subr.bf16.mxu0 0
        %1543 = vmatpush2.bf16.msra.mxu0 0
        %1544 = vmatprep.subr.bf16.mxu0 0
        %1545 = vmatpush2.bf16.msra.mxu0 0
        %1546 = vmatprep.mubr.bf16.mxu0 0
        %1547 = vmatmul.mubr.bf16.gmra.mxu0 %v1509
        %v1548 = vpop.f32.mrf.mxu0
        %v1549 = vadd.f32 0.0, %v1548
        %v1550 = vpop.f32.mrf.mxu0
        %v1551 = vpop.f32.mrf.mxu0
        %v1552 = vpop.f32.mrf.mxu0
        %1553 = vdwg.mxu0
        %1554 = vrot.lane.b32.xlu0 %v876, 104
        %v1555 = vpop.permute.xlu0 %1554
        %1556 = vrot.lane.b32.xlu0 %v878, 72
        %v1557 = vpop.permute.xlu0 %1556
        %v1559 = vsel %vm895, %v1555, 0
        %v1562 = vsel %vm895, %v1557, 0
        %1564 = vmatprep.subr.bf16.mxu0 0
        %1565 = vmatpush1.bf16.xpose.msra.mxu0 0
        %1566 = vmatprep.subr.bf16.mxu0 0
        %1567 = vmatpush1.bf16.xpose.msra.mxu0 0
        %1568 = vmatprep.subr.bf16.mxu0 0
        %1569 = vmatpush1.bf16.xpose.msra.mxu0 0
        %1570 = vmatprep.subr.bf16.mxu0 0
        %1571 = vmatpush1.bf16.xpose.msra.mxu0 0
        %1572 = vmatprep.subr.bf16.mxu0 0
        %1573 = vmatpush1.bf16.xpose.msra.mxu0 0
        %1574 = vmatprep.subr.bf16.mxu0 0
        %1575 = vmatpush1.bf16.xpose.msra.mxu0 0
        %1576 = vmatprep.subr.bf16.mxu0 0
        %1577 = vmatpush1.bf16.xpose.msra.mxu0 0
        %1578 = vmatprep.subr.bf16.mxu0 0
        %1579 = vmatpush1.bf16.xpose.msra.mxu0 %v1562
        %1580 = vmatprep.subr.bf16.mxu0 0
        %1581 = vmatpush2.bf16.xpose.msra.mxu0 0
        %1582 = vmatprep.subr.bf16.mxu0 0
        %1583 = vmatpush2.bf16.xpose.msra.mxu0 0
        %1584 = vmatprep.subr.bf16.mxu0 0
        %1585 = vmatpush2.bf16.xpose.msra.mxu0 0
        %1586 = vmatprep.subr.bf16.mxu0 0
        %1587 = vmatpush2.bf16.xpose.msra.mxu0 0
        %1588 = vmatprep.subr.bf16.mxu0 0
        %1589 = vmatpush2.bf16.xpose.msra.mxu0 0
        %1590 = vmatprep.subr.bf16.mxu0 0
        %1591 = vmatpush2.bf16.xpose.msra.mxu0 0
        %1592 = vmatprep.subr.bf16.mxu0 0
        %1593 = vmatpush2.bf16.xpose.msra.mxu0 0
        %1594 = vmatprep.subr.bf16.mxu0 0
        %1595 = vmatpush2.bf16.xpose.msra.mxu0 0
        %1596 = vmatprep.mubr.bf16.mxu0 0
        %1597 = vmatmul.mubr.bf16.gmra.mxu0 %v1559
        %v1598 = vpop.f32.mrf.mxu0
        %v1599 = vadd.f32 %v885, %v1598
        %v1600 = vpop.f32.mrf.mxu0
        %v1601 = vpop.f32.mrf.mxu0
        %v1602 = vpop.f32.mrf.mxu0
        %1603 = vdwg.mxu0
        %1604 = vrot.lane.b32.xlu0 %v877, 104
        %v1605 = vpop.permute.xlu0 %1604
        %1606 = vrot.lane.b32.xlu0 %v879, 72
        %v1607 = vpop.permute.xlu0 %1606
        %v1609 = vsel %vm895, %v1605, 0
        %v1612 = vsel %vm895, %v1607, 0
        %1614 = vmatprep.subr.bf16.mxu0 0
        %1615 = vmatpush1.bf16.xpose.msra.mxu0 0
        %1616 = vmatprep.subr.bf16.mxu0 0
        %1617 = vmatpush1.bf16.xpose.msra.mxu0 0
        %1618 = vmatprep.subr.bf16.mxu0 0
        %1619 = vmatpush1.bf16.xpose.msra.mxu0 0
        %1620 = vmatprep.subr.bf16.mxu0 0
        %1621 = vmatpush1.bf16.xpose.msra.mxu0 0
        %1622 = vmatprep.subr.bf16.mxu0 0
        %1623 = vmatpush1.bf16.xpose.msra.mxu0 0
        %1624 = vmatprep.subr.bf16.mxu0 0
        %1625 = vmatpush1.bf16.xpose.msra.mxu0 0
        %1626 = vmatprep.subr.bf16.mxu0 0
        %1627 = vmatpush1.bf16.xpose.msra.mxu0 0
        %1628 = vmatprep.subr.bf16.mxu0 0
        %1629 = vmatpush1.bf16.xpose.msra.mxu0 %v1612
        %1630 = vmatprep.subr.bf16.mxu0 0
        %1631 = vmatpush2.bf16.xpose.msra.mxu0 0
        %1632 = vmatprep.subr.bf16.mxu0 0
        %1633 = vmatpush2.bf16.xpose.msra.mxu0 0
        %1634 = vmatprep.subr.bf16.mxu0 0
        %1635 = vmatpush2.bf16.xpose.msra.mxu0 0
        %1636 = vmatprep.subr.bf16.mxu0 0
        %1637 = vmatpush2.bf16.xpose.msra.mxu0 0
        %1638 = vmatprep.subr.bf16.mxu0 0
        %1639 = vmatpush2.bf16.xpose.msra.mxu0 0
        %1640 = vmatprep.subr.bf16.mxu0 0
        %1641 = vmatpush2.bf16.xpose.msra.mxu0 0
        %1642 = vmatprep.subr.bf16.mxu0 0
        %1643 = vmatpush2.bf16.xpose.msra.mxu0 0
        %1644 = vmatprep.subr.bf16.mxu0 0
        %1645 = vmatpush2.bf16.xpose.msra.mxu0 0
        %1646 = vmatprep.mubr.bf16.mxu0 0
        %1647 = vmatmul.mubr.bf16.gmra.mxu0 %v1609
        %v1648 = vpop.f32.mrf.mxu0
        %v1649 = vadd.f32 %v889, %v1648
        %v1650 = vpop.f32.mrf.mxu0
        %v1651 = vpop.f32.mrf.mxu0
        %v1652 = vpop.f32.mrf.mxu0
        %1653 = vdwg.mxu0
        %v1654 = vsel %vm895, %v1599, -inf
        %1655 = vmax.xlane.f32.xlu0 %v1654
        %v1656 = vpop.xlane.xlu0 %1655
        %v1657 = vsel %vm895, %v1649, -inf
        %1658 = vmax.xlane.f32.xlu0 %v1657
        %v1659 = vpop.xlane.xlu0 %1658
        %v1660 = vsub.f32 %v1599, %v1656
        %v1661 = vsub.f32 %v1649, %v1659
        %v1662 = vmul.f32 %v1660, 1.442695
        %v1663 = vpow.pop %v1662
        %v1664 = vmul.f32 %v1661, 1.442695
        %v1665 = vpow.pop %v1664
        %v1666 = vsel %vm895, %v1663, 0.0
        %1667 = vadd.xlane.f32.xlu0 %v1666
        %v1668 = vpop.xlane.xlu0 %1667
        %v1669 = vsel %vm895, %v1665, 0.0
        %1670 = vadd.xlane.f32.xlu0 %v1669
        %v1671 = vpop.xlane.xlu0 %1670
        %v1672 = vrcp.pop %v1668
        %v1673 = vrcp.pop %v1671
        %v1674 = vmul.f32 %v1663, %v1672
        %v1675 = vmul.f32 %v1665, %v1673
        %v1676 = vpack.c.bf16 %v1674, %v1674
        %v1677 = vpack.c.bf16 %v1675, %v1675
        %1678 = vrot.lane.b32.xlu0 %v878, 40
        %v1679 = vpop.permute.xlu0 %1678
        %v1681 = vsel %vm895, %v1676, 0
        %v1684 = vsel %vm1020, %v1679, 0
        %1686 = vmatprep.subr.bf16.mxu0 0
        %1687 = vmatpush1.bf16.msra.mxu0 0
        %1688 = vmatprep.subr.bf16.mxu0 0
        %1689 = vmatpush1.bf16.msra.mxu0 0
        %1690 = vmatprep.subr.bf16.mxu0 0
        %1691 = vmatpush1.bf16.msra.mxu0 0
        %1692 = vmatprep.subr.bf16.mxu0 0
        %1693 = vmatpush1.bf16.msra.mxu0 0
        %1694 = vmatprep.subr.bf16.mxu0 0
        %1695 = vmatpush1.bf16.msra.mxu0 0
        %1696 = vmatprep.subr.bf16.mxu0 0
        %1697 = vmatpush1.bf16.msra.mxu0 0
        %1698 = vmatprep.subr.bf16.mxu0 0
        %1699 = vmatpush1.bf16.msra.mxu0 0
        %1700 = vmatprep.subr.bf16.mxu0 0
        %1701 = vmatpush1.bf16.msra.mxu0 %v1684
        %1702 = vmatprep.subr.bf16.mxu0 0
        %1703 = vmatpush2.bf16.msra.mxu0 0
        %1704 = vmatprep.subr.bf16.mxu0 0
        %1705 = vmatpush2.bf16.msra.mxu0 0
        %1706 = vmatprep.subr.bf16.mxu0 0
        %1707 = vmatpush2.bf16.msra.mxu0 0
        %1708 = vmatprep.subr.bf16.mxu0 0
        %1709 = vmatpush2.bf16.msra.mxu0 0
        %1710 = vmatprep.subr.bf16.mxu0 0
        %1711 = vmatpush2.bf16.msra.mxu0 0
        %1712 = vmatprep.subr.bf16.mxu0 0
        %1713 = vmatpush2.bf16.msra.mxu0 0
        %1714 = vmatprep.subr.bf16.mxu0 0
        %1715 = vmatpush2.bf16.msra.mxu0 0
        %1716 = vmatprep.subr.bf16.mxu0 0
        %1717 = vmatpush2.bf16.msra.mxu0 0
        %1718 = vmatprep.mubr.bf16.mxu0 0
        %1719 = vmatmul.mubr.bf16.gmra.mxu0 %v1681
        %v1720 = vpop.f32.mrf.mxu0
        %v1721 = vadd.f32 0.0, %v1720
        %v1722 = vpop.f32.mrf.mxu0
        %v1723 = vpop.f32.mrf.mxu0
        %v1724 = vpop.f32.mrf.mxu0
        %1725 = vdwg.mxu0
        %1726 = vrot.lane.b32.xlu0 %v879, 40
        %v1727 = vpop.permute.xlu0 %1726
        %v1729 = vsel %vm895, %v1677, 0
        %v1732 = vsel %vm1020, %v1727, 0
        %1734 = vmatprep.subr.bf16.mxu0 0
        %1735 = vmatpush1.bf16.msra.mxu0 0
        %1736 = vmatprep.subr.bf16.mxu0 0
        %1737 = vmatpush1.bf16.msra.mxu0 0
        %1738 = vmatprep.subr.bf16.mxu0 0
        %1739 = vmatpush1.bf16.msra.mxu0 0
        %1740 = vmatprep.subr.bf16.mxu0 0
        %1741 = vmatpush1.bf16.msra.mxu0 0
        %1742 = vmatprep.subr.bf16.mxu0 0
        %1743 = vmatpush1.bf16.msra.mxu0 0
        %1744 = vmatprep.subr.bf16.mxu0 0
        %1745 = vmatpush1.bf16.msra.mxu0 0
        %1746 = vmatprep.subr.bf16.mxu0 0
        %1747 = vmatpush1.bf16.msra.mxu0 0
        %1748 = vmatprep.subr.bf16.mxu0 0
        %1749 = vmatpush1.bf16.msra.mxu0 %v1732
        %1750 = vmatprep.subr.bf16.mxu0 0
        %1751 = vmatpush2.bf16.msra.mxu0 0
        %1752 = vmatprep.subr.bf16.mxu0 0
        %1753 = vmatpush2.bf16.msra.mxu0 0
        %1754 = vmatprep.subr.bf16.mxu0 0
        %1755 = vmatpush2.bf16.msra.mxu0 0
        %1756 = vmatprep.subr.bf16.mxu0 0
        %1757 = vmatpush2.bf16.msra.mxu0 0
        %1758 = vmatprep.subr.bf16.mxu0 0
        %1759 = vmatpush2.bf16.msra.mxu0 0
        %1760 = vmatprep.subr.bf16.mxu0 0
        %1761 = vmatpush2.bf16.msra.mxu0 0
        %1762 = vmatprep.subr.bf16.mxu0 0
        %1763 = vmatpush2.bf16.msra.mxu0 0
        %1764 = vmatprep.subr.bf16.mxu0 0
        %1765 = vmatpush2.bf16.msra.mxu0 0
        %1766 = vmatprep.mubr.bf16.mxu0 0
        %1767 = vmatmul.mubr.bf16.gmra.mxu0 %v1729
        %v1768 = vpop.f32.mrf.mxu0
        %v1769 = vadd.f32 0.0, %v1768
        %v1770 = vpop.f32.mrf.mxu0
        %v1771 = vpop.f32.mrf.mxu0
        %v1772 = vpop.f32.mrf.mxu0
        %1773 = vdwg.mxu0
        %1776 = vrot.lane.b32.xlu0 %v1281, 8
        %v1777 = vpop.permute.xlu0 %1776
        %1778 = vrot.lane.b32.xlu0 %v1329, 8
        %v1779 = vpop.permute.xlu0 %1778
        %1784 = vrot.lane.b32.xlu0 %v1501, 16
        %v1785 = vpop.permute.xlu0 %1784
        %1786 = vrot.lane.b32.xlu0 %v1549, 16
        %v1787 = vpop.permute.xlu0 %1786
        %1792 = vrot.lane.b32.xlu0 %v1721, 24
        %v1793 = vpop.permute.xlu0 %1792
        %1794 = vrot.lane.b32.xlu0 %v1769, 24
        %v1795 = vpop.permute.xlu0 %1794
        %v1798 = vsel %vm895, %v1059, %v1777
        %v1799 = vsel %vm895, %v1107, %v1779
        %vm1800 = vcmask 130048
        %v1801 = vsel %vm1800, %v1798, %v1785
        %v1802 = vsel %vm1800, %v1799, %v1787
        %vm1803 = vcmask 195584
        %v1804 = vsel %vm1803, %v1801, %v1793
        %v1805 = vsel %vm1803, %v1802, %v1795
        %v1806 = vpack.c.bf16 %v1805, %v1804
        %v1807 = vld [vmem:[%s719] sm:$0xf]
        %v1808 = vld [vmem:[%s719 + $0x4] sm:$0xf]
        %v1809 = vld [vmem:[%s719 + $0x8] sm:$0xf]
        %v1810 = vld [vmem:[%s719 + $0xc] sm:$0xf]
        %v1811 = vld [vmem:[%s722] sm:$0x1]
        %v1813 = vlaneseq
        %v1814 = vshrl.u32 %v1813, 7
        %v1815 = vsub.s32 0, %v1814
        %v1816 = vrot.slane %v1811, %v1815
        %v1822 = vunpack.c.l.b16 %v1807
        %v1823 = vunpack.c.l.b16 %v1808
        %v1824 = vunpack.c.l.b16 %v1809
        %v1825 = vunpack.c.l.b16 %v1810
        %v1826 = vpack.c.b16 %v1823, %v1822
        %v1827 = vpack.c.b16 %v1825, %v1824
        %v1831 = vsel %vm760, %v1806, 0
        %1833 = vmatprep.subr.bf16.mxu0 0
        %1834 = vmatpush1.bf16.msra.mxu0 0
        %1835 = vmatprep.subr.bf16.mxu0 0
        %1836 = vmatpush1.bf16.msra.mxu0 0
        %1837 = vmatprep.subr.bf16.mxu0 0
        %1838 = vmatpush1.bf16.msra.mxu0 0
        %1839 = vmatprep.subr.bf16.mxu0 0
        %1840 = vmatpush1.bf16.msra.mxu0 0
        %1841 = vmatprep.subr.bf16.mxu0 0
        %1842 = vmatpush1.bf16.msra.mxu0 0
        %1843 = vmatprep.subr.bf16.mxu0 0
        %1844 = vmatpush1.bf16.msra.mxu0 0
        %1845 = vmatprep.subr.bf16.mxu0 0
        %1846 = vmatpush1.bf16.msra.mxu0 %v1827
        %1847 = vmatprep.subr.bf16.mxu0 0
        %1848 = vmatpush1.bf16.msra.mxu0 %v1826
        %1849 = vmatprep.subr.bf16.mxu0 0
        %1850 = vmatpush2.bf16.msra.mxu0 0
        %1851 = vmatprep.subr.bf16.mxu0 0
        %1852 = vmatpush2.bf16.msra.mxu0 0
        %1853 = vmatprep.subr.bf16.mxu0 0
        %1854 = vmatpush2.bf16.msra.mxu0 0
        %1855 = vmatprep.subr.bf16.mxu0 0
        %1856 = vmatpush2.bf16.msra.mxu0 0
        %1857 = vmatprep.subr.bf16.mxu0 0
        %1858 = vmatpush2.bf16.msra.mxu0 0
        %1859 = vmatprep.subr.bf16.mxu0 0
        %1860 = vmatpush2.bf16.msra.mxu0 0
        %1861 = vmatprep.subr.bf16.mxu0 0
        %1862 = vmatpush2.bf16.msra.mxu0 0
        %1863 = vmatprep.subr.bf16.mxu0 0
        %1864 = vmatpush2.bf16.msra.mxu0 0
        %1865 = vmatprep.mubr.bf16.mxu0 0
        %1866 = vmatmul.mubr.bf16.gmra.mxu0 %v1831
        %v1867 = vpop.f32.mrf.mxu0
        %v1868 = vadd.f32 %v1816, %v1867
        %v1869 = vpop.f32.mrf.mxu0
        %v1870 = vpop.f32.mrf.mxu0
        %v1871 = vadd.f32 %v1816, %v1870
        %v1872 = vpop.f32.mrf.mxu0
        %1873 = vdwg.mxu0
        %v1874 = vadd.f32 %v756, %v1868
        %v1875 = vadd.f32 %v757, %v1871
        %v1876 = vld [vmem:[%s725] sm:$0x1]
        %v1877 = vld [vmem:[%s728] sm:$0x1]
        %v1878 = vsel %vm760, %v1874, 0.0
        %1879 = vadd.xlane.f32.xlu0 %v1878
        %v1880 = vpop.xlane.xlu0 %1879
        %v1881 = vsel %vm760, %v1875, 0.0
        %1882 = vadd.xlane.f32.xlu0 %v1881
        %v1883 = vpop.xlane.xlu0 %1882
        %v1884 = vmul.f32 %v1880, %v767
        %v1885 = vmul.f32 %v1883, %v767
        %v1886 = vsub.f32 %v1874, %v1884
        %v1887 = vsub.f32 %v1875, %v1885
        %v1888 = vmul.f32 %v1886, %v1886
        %v1889 = vmul.f32 %v1887, %v1887
        %v1890 = vsel %vm760, %v1888, 0.0
        %1891 = vadd.xlane.f32.xlu0 %v1890
        %v1892 = vpop.xlane.xlu0 %1891
        %v1893 = vsel %vm760, %v1889, 0.0
        %1894 = vadd.xlane.f32.xlu0 %v1893
        %v1895 = vpop.xlane.xlu0 %1894
        %v1896 = vmul.f32 %v1892, %v767
        %v1897 = vmul.f32 %v1895, %v767
        %v1898 = vadd.f32 %v1896, 1e-05
        %v1899 = vadd.f32 %v1897, 1e-05
        %v1900 = vrsqrt.pop %v1898
        %v1901 = vrsqrt.pop %v1899
        %v1902 = vmul.f32 %v1886, %v1900
        %v1903 = vmul.f32 %v1887, %v1901
        %v1905 = vlaneseq
        %v1906 = vshrl.u32 %v1905, 7
        %v1907 = vsub.s32 0, %v1906
        %v1908 = vrot.slane %v1876, %v1907
        %v1910 = vmul.f32 %v1902, %v1908
        %v1911 = vmul.f32 %v1903, %v1908
        %v1913 = vlaneseq
        %v1914 = vshrl.u32 %v1913, 7
        %v1915 = vsub.s32 0, %v1914
        %v1916 = vrot.slane %v1877, %v1915
        %v1918 = vadd.f32 %v1910, %v1916
        %v1919 = vadd.f32 %v1911, %v1916
        %v1920 = vpack.c.bf16 %v1919, %v1918
        %v1921 = vld [vmem:[%s733] sm:$0xf]
        %v1922 = vld [vmem:[%s733 + $0x4] sm:$0xf]
        %v1923 = vld [vmem:[%s733 + $0x8] sm:$0xf]
        %v1924 = vld [vmem:[%s733 + $0xc] sm:$0xf]
        %v1925 = vld [vmem:[%s736] sm:$0x1]
        %v1927 = vlaneseq
        %v1928 = vshrl.u32 %v1927, 7
        %v1929 = vsub.s32 0, %v1928
        %v1930 = vrot.slane %v1925, %v1929
        %v1936 = vunpack.c.l.b16 %v1921
        %v1937 = vunpack.c.l.b16 %v1922
        %v1938 = vunpack.c.l.b16 %v1923
        %v1939 = vunpack.c.l.b16 %v1924
        %v1940 = vpack.c.b16 %v1937, %v1936
        %v1941 = vpack.c.b16 %v1939, %v1938
        %v1945 = vsel %vm760, %v1920, 0
        %1947 = vmatprep.subr.bf16.mxu0 0
        %1948 = vmatpush1.bf16.msra.mxu0 0
        %1949 = vmatprep.subr.bf16.mxu0 0
        %1950 = vmatpush1.bf16.msra.mxu0 0
        %1951 = vmatprep.subr.bf16.mxu0 0
        %1952 = vmatpush1.bf16.msra.mxu0 0
        %1953 = vmatprep.subr.bf16.mxu0 0
        %1954 = vmatpush1.bf16.msra.mxu0 0
        %1955 = vmatprep.subr.bf16.mxu0 0
        %1956 = vmatpush1.bf16.msra.mxu0 0
        %1957 = vmatprep.subr.bf16.mxu0 0
        %1958 = vmatpush1.bf16.msra.mxu0 0
        %1959 = vmatprep.subr.bf16.mxu0 0
        %1960 = vmatpush1.bf16.msra.mxu0 %v1941
        %1961 = vmatprep.subr.bf16.mxu0 0
        %1962 = vmatpush1.bf16.msra.mxu0 %v1940
        %1963 = vmatprep.subr.bf16.mxu0 0
        %1964 = vmatpush2.bf16.msra.mxu0 0
        %1965 = vmatprep.subr.bf16.mxu0 0
        %1966 = vmatpush2.bf16.msra.mxu0 0
        %1967 = vmatprep.subr.bf16.mxu0 0
        %1968 = vmatpush2.bf16.msra.mxu0 0
        %1969 = vmatprep.subr.bf16.mxu0 0
        %1970 = vmatpush2.bf16.msra.mxu0 0
        %1971 = vmatprep.subr.bf16.mxu0 0
        %1972 = vmatpush2.bf16.msra.mxu0 0
        %1973 = vmatprep.subr.bf16.mxu0 0
        %1974 = vmatpush2.bf16.msra.mxu0 0
        %1975 = vmatprep.subr.bf16.mxu0 0
        %1976 = vmatpush2.bf16.msra.mxu0 0
        %1977 = vmatprep.subr.bf16.mxu0 0
        %1978 = vmatpush2.bf16.msra.mxu0 0
        %1979 = vmatprep.mubr.bf16.mxu0 0
        %1980 = vmatmul.mubr.bf16.gmra.mxu0 %v1945
        %v1981 = vpop.f32.mrf.mxu0
        %v1982 = vadd.f32 %v1930, %v1981
        %v1983 = vpop.f32.mrf.mxu0
        %v1984 = vpop.f32.mrf.mxu0
        %v1985 = vadd.f32 %v1930, %v1984
        %v1986 = vpop.f32.mrf.mxu0
        %1987 = vdwg.mxu0
        %v1988 = vmax.f32 %v1982, 0.0
        %v1989 = vmax.f32 %v1985, 0.0
        %v1990 = vpack.c.bf16 %v1989, %v1988
        %v1991 = vld [vmem:[%s741] sm:$0xf]
        %v1992 = vld [vmem:[%s741 + $0x4] sm:$0xf]
        %v1993 = vld [vmem:[%s741 + $0x8] sm:$0xf]
        %v1994 = vld [vmem:[%s741 + $0xc] sm:$0xf]
        %v1995 = vld [vmem:[%s741 + $0x10] sm:$0xf]
        %v1996 = vld [vmem:[%s741 + $0x14] sm:$0xf]
        %v1997 = vld [vmem:[%s741 + $0x18] sm:$0xf]
        %v1998 = vld [vmem:[%s741 + $0x1c] sm:$0xf]
        %v1999 = vld [vmem:[%s744] sm:$0x1]
        %v2001 = vlaneseq
        %v2002 = vshrl.u32 %v2001, 7
        %v2003 = vsub.s32 0, %v2002
        %v2004 = vrot.slane %v1999, %v2003
        %v2014 = vunpack.c.l.b16 %v1991
        %v2015 = vunpack.c.l.b16 %v1992
        %v2016 = vunpack.c.l.b16 %v1993
        %v2017 = vunpack.c.l.b16 %v1994
        %v2018 = vunpack.c.l.b16 %v1995
        %v2019 = vunpack.c.l.b16 %v1996
        %v2020 = vunpack.c.l.b16 %v1997
        %v2021 = vunpack.c.l.b16 %v1998
        %v2022 = vpack.c.b16 %v2015, %v2014
        %v2023 = vpack.c.b16 %v2017, %v2016
        %v2024 = vpack.c.b16 %v2019, %v2018
        %v2025 = vpack.c.b16 %v2021, %v2020
        %vm2030 = vcmask 523264
        %v2032 = vsel %vm2030, %v1990, 0
        %2034 = vmatprep.subr.bf16.mxu0 0
        %2035 = vmatpush1.bf16.msra.mxu0 0
        %2036 = vmatprep.subr.bf16.mxu0 0
        %2037 = vmatpush1.bf16.msra.mxu0 0
        %2038 = vmatprep.subr.bf16.mxu0 0
        %2039 = vmatpush1.bf16.msra.mxu0 0
        %2040 = vmatprep.subr.bf16.mxu0 0
        %2041 = vmatpush1.bf16.msra.mxu0 0
        %2042 = vmatprep.subr.bf16.mxu0 0
        %2043 = vmatpush1.bf16.msra.mxu0 %v2025
        %2044 = vmatprep.subr.bf16.mxu0 0
        %2045 = vmatpush1.bf16.msra.mxu0 %v2024
        %2046 = vmatprep.subr.bf16.mxu0 0
        %2047 = vmatpush1.bf16.msra.mxu0 %v2023
        %2048 = vmatprep.subr.bf16.mxu0 0
        %2049 = vmatpush1.bf16.msra.mxu0 %v2022
        %2050 = vmatprep.subr.bf16.mxu0 0
        %2051 = vmatpush2.bf16.msra.mxu0 0
        %2052 = vmatprep.subr.bf16.mxu0 0
        %2053 = vmatpush2.bf16.msra.mxu0 0
        %2054 = vmatprep.subr.bf16.mxu0 0
        %2055 = vmatpush2.bf16.msra.mxu0 0
        %2056 = vmatprep.subr.bf16.mxu0 0
        %2057 = vmatpush2.bf16.msra.mxu0 0
        %2058 = vmatprep.subr.bf16.mxu0 0
        %2059 = vmatpush2.bf16.msra.mxu0 0
        %2060 = vmatprep.subr.bf16.mxu0 0
        %2061 = vmatpush2.bf16.msra.mxu0 0
        %2062 = vmatprep.subr.bf16.mxu0 0
        %2063 = vmatpush2.bf16.msra.mxu0 0
        %2064 = vmatprep.subr.bf16.mxu0 0
        %2065 = vmatpush2.bf16.msra.mxu0 0
        %2066 = vmatprep.mubr.bf16.mxu0 0
        %2067 = vmatmul.mubr.bf16.gmra.mxu0 %v2032
        %v2068 = vpop.f32.mrf.mxu0
        %v2069 = vadd.f32 %v2004, %v2068
        %v2070 = vpop.f32.mrf.mxu0
        %v2071 = vpop.f32.mrf.mxu0
        %v2072 = vadd.f32 %v2004, %v2071
        %v2073 = vpop.f32.mrf.mxu0
        %2074 = vdwg.mxu0
        %v2075 = vadd.f32 %v1874, %v2069
        %v2076 = vadd.f32 %v1875, %v2072
        %2077 = vst.msk [vmem:[#allocation2] sm:$0xff] %vm760, %v2075
        %2078 = vst.msk [vmem:[#allocation2 + $0x8] sm:$0xff] %vm760, %v2076
        %p2079 = scmp.eq.s32.totalorder %s35, 1
        // Predicated region
        $region97: #{tpu_custom_call.1} parent=83 // pred_check
          %p2080 = pneg %p2079
        $region98: #{tpu_custom_call.1} parent=83 // pred_check_branch
          %2082 = sbr.rel (%p2080) target = $region100
        $region99: #{tpu_custom_call.1} parent=83 // pred_region
          %v2083 = vld [vmem:[%s14] sm:$0x1]
          %v2084 = vld [vmem:[%s15] sm:$0x1]
          %v2085 = vsel %vm760, %v2075, 0.0
          %2086 = vadd.xlane.f32.xlu0 %v2085
          %v2087 = vpop.xlane.xlu0 %2086
          %v2088 = vsel %vm760, %v2076, 0.0
          %2089 = vadd.xlane.f32.xlu0 %v2088
          %v2090 = vpop.xlane.xlu0 %2089
          %v2091 = vmul.f32 %v2087, %v767
          %v2092 = vmul.f32 %v2090, %v767
          %v2093 = vsub.f32 %v2075, %v2091
          %v2094 = vsub.f32 %v2076, %v2092
          %v2095 = vmul.f32 %v2093, %v2093
          %v2096 = vmul.f32 %v2094, %v2094
          %v2097 = vsel %vm760, %v2095, 0.0
          %2098 = vadd.xlane.f32.xlu0 %v2097
          %v2099 = vpop.xlane.xlu0 %2098
          %v2100 = vsel %vm760, %v2096, 0.0
          %2101 = vadd.xlane.f32.xlu0 %v2100
          %v2102 = vpop.xlane.xlu0 %2101
          %v2103 = vmul.f32 %v2099, %v767
          %v2104 = vmul.f32 %v2102, %v767
          %v2105 = vadd.f32 %v2103, 1e-05
          %v2106 = vadd.f32 %v2104, 1e-05
          %v2107 = vrsqrt.pop %v2105
          %v2108 = vrsqrt.pop %v2106
          %v2109 = vmul.f32 %v2093, %v2107
          %v2110 = vmul.f32 %v2094, %v2108
          %v2112 = vlaneseq
          %v2113 = vshrl.u32 %v2112, 7
          %v2114 = vsub.s32 0, %v2113
          %v2115 = vrot.slane %v2083, %v2114
          %v2117 = vmul.f32 %v2109, %v2115
          %v2118 = vmul.f32 %v2110, %v2115
          %v2120 = vlaneseq
          %v2121 = vshrl.u32 %v2120, 7
          %v2122 = vsub.s32 0, %v2121
          %v2123 = vrot.slane %v2084, %v2122
          %v2125 = vadd.f32 %v2117, %v2123
          %v2126 = vadd.f32 %v2118, %v2123
          %2127 = vst.msk [vmem:[#allocation8] sm:$0xff] %vm760, %v2125
          %2128 = vst.msk [vmem:[#allocation8 + $0x8] sm:$0xff] %vm760, %v2126
        $region100: #{tpu_custom_call.1} parent=83 // pred_fallthru
          _
        // Predicated region
        $region101: #{tpu_custom_call.1} parent=83 // pred_check
          %p2129 = pneg %p466
        $region102: #{tpu_custom_call.1} parent=83 // pred_check_branch
          %2131 = sbr.rel (%p2129) target = $region104
        $region103: #{tpu_custom_call.1} parent=83 // pred_region
          %s2132 = smul.u32 2, %s34
          %s2134 = ssub.s32 256, 256
          %2135 = vsyncadd [#allocation5], %s2134
          %s2136 = smul.addr %s2132, 128
          %s2137 = scalar_lea.hbm %s16, %s2136
          %s2138 = sshll.u32 [#allocation8], 4
          %s2139 = int_to_ptr.vmem [resolvable:$true] %s2138
          %2144 = dma.vmem_to_hbm [thread:$0]  %s2139, 256, %s2137, [#allocation5], 128, 128, 8
        $region104: #{tpu_custom_call.1} parent=83 // pred_fallthru
          _
        // Predicated region
        $region105: #{tpu_custom_call.1} parent=83 // pred_check
          %p2145 = pneg %p466
        $region106: #{tpu_custom_call.1} parent=83 // pred_check_branch
          %2147 = sbr.rel (%p2145) target = $region108
        $region107: #{tpu_custom_call.1} parent=83 // pred_region
          %2148 = dma.done [#allocation5], 256
        $region108: #{tpu_custom_call.1} parent=83 // pred_fallthru
          _
      $region84: #{tpu_custom_call.1} parent=5 // pred_fallthru
        _
      %p2149 = scmp.le.s32.totalorder 2, %s25
      // Predicated region
      $region109: #{tpu_custom_call.1} parent=5 // pred_check
        %p2150 = pneg %p2149
      $region110: #{tpu_custom_call.1} parent=5 // pred_check_branch
        %2152 = sbr.rel (%p2150) target = $region112
      $region111: #{tpu_custom_call.1} parent=5 // pred_region
        %s2153 = ssub.s32 %s25, 2
      $region112: #{tpu_custom_call.1} parent=5 // pred_fallthru
        _
    $region6: #{tpu_custom_call.1} parent=1 // loop_footer
      %s29 = sadd.s32 1, %s25
    $region7: #{tpu_custom_call.1} parent=1 // loop_footer_branch
      %24 = sbr.rel target = $region3
    $region8: #{tpu_custom_call.1} parent=1 // loop_exit
      _
    %2154 = vsyncpa [#allocation4], 1
    %s2155 = scalar_lea.sflag [#allocation4], 1
    %2156 = vsyncpa %s2155, 1
    %2157 = vsyncpa [#allocation7], 1
    %2158 = vsyncpa [#allocation5], 1
    %s2159 = scalar_lea.sflag [#allocation5], 1
    %2160 = vsyncpa %s2159, 1

</llo_original>
